<compile_context>
chip_gen: v5e
topology: v5e:2x2
jax: 0.10.0
libtpu: 0.0.40
codegen_flags: <defaults>
</compile_context>

<pallas_src>
import jax
import jax.numpy as jnp
from jax.experimental import pallas as pl
from jax.experimental.pallas import tpu as pltpu

EMB_DIM = 64        # stands in for BERT's 768
HIDDEN = 32         # stands in for RNNLstm dimension=1024
FC_OUT = 16         # stands in for fc output 150
SIM_HID = 8         # Similarity hidden dim
NUM_CLASSES = 5     # Similarity num classes

T_BUCKET = 8        # fixed sequence-length bucket (statically unrolled)
PB = 8              # sentence pairs per grid block
RS = 2 * PB         # sentence rows per grid block (rows [0:PB]=left, [PB:2PB]=right)
OUT_PAD = 128       # lane-dense padded class dim for the output store


# ----------------------------------------------------------------------------
# Fused kernel: batched bidirectional LSTM recurrence + RNNLstm fc + Similarity.
# ----------------------------------------------------------------------------
def _fused_kernel(x_ref, len_ref, wih_ref, b_ref, whh_ref,
                  wfc_ref, bfc_ref, wh_ref, bh_ref, wp_ref, bp_ref,
                  out_ref):
    f32 = jnp.float32
    H = HIDDEN

    # Hoisted input projection: every timestep of every sentence row of this
    # block through both directions' (block-diagonal, gate-reordered) input
    # weights in one MXU matmul.  (T*RS, 2E)bf16 @ (2E, 8H)bf16 -> f32.
    xg_all = (jnp.dot(x_ref[...], wih_ref[...], preferred_element_type=f32)
              + b_ref[...])                                    # (T*RS, 8H)

    lens = len_ref[...]                                        # (RS, 1) int32

    # Carry: one row per sentence; lanes [0:H] = forward dir, [H:2H] = backward.
    h = jnp.zeros((RS, 2 * H), f32)
    c = jnp.zeros((RS, 2 * H), f32)

    # Statically unrolled over the fixed T bucket; every slice below is static.
    for t in range(T_BUCKET):
        xg = xg_all[t * RS:(t + 1) * RS, :]                    # (RS, 8H) contiguous
        gh = jnp.dot(h.astype(jnp.bfloat16), whh_ref[...],
                     preferred_element_type=f32)               # (RS, 8H)
        gates = xg + gh            # layout: [i_f | i_b | f_f | f_b | g_f | g_b | o_f | o_b]

        # g-gate columns of the fused weights were pre-scaled by 2, so a single
        # full-width tanh(0.5*gates) yields tanh(g) directly while
        # sigmoid(z) = 0.5*(tanh(z/2)+1) handles i/f/o.
        tg = jnp.tanh(0.5 * gates)
        i_g = 0.5 * (tg[:, 0 * H:2 * H] + 1.0)
        f_g = 0.5 * (tg[:, 2 * H:4 * H] + 1.0)
        g_g = tg[:, 4 * H:6 * H]
        o_g = 0.5 * (tg[:, 6 * H:8 * H] + 1.0)

        c_new = f_g * c + i_g * g_g
        h_new = o_g * jnp.tanh(c_new)                          # (RS, 2H): next carry directly

        # Freeze padded timesteps (runtime lengths; also neutralizes length 0).
        valid = lens > t                                       # (RS, 1) bool
        c = jnp.where(valid, c_new, c)
        h = jnp.where(valid, h_new, h)

    # Each h row == [fwd final hidden | bwd hidden at position 0] == RNNLstm's
    # cat(out_forward, out_reverse) feature for that sentence.
    # TODO(synk): nn.Dropout(p=0.5) treated as eval-mode identity (no RNG mask).
    fc = jax.nn.sigmoid(
        jnp.dot(h, wfc_ref[...], preferred_element_type=f32) + bfc_ref[...])
    l_vec = fc[0:PB, :]           # left sentences of the PB pairs
    r_vec = fc[PB:2 * PB, :]      # right sentences

    # Similarity head: mult / abs-diff -> Linear+sigmoid -> Linear -> log_softmax.
    vec_dist = jnp.concatenate([l_vec * r_vec, jnp.abs(l_vec - r_vec)], axis=1)
    hid = jax.nn.sigmoid(
        jnp.dot(vec_dist, wh_ref[...], preferred_element_type=f32) + bh_ref[...])
    # wp/bp are padded to 128 lanes (pad bias = -1e30) -> lane-dense unmasked
    # store and an exact log_softmax over the 5 real classes.
    logits = jnp.dot(hid, wp_ref[...], preferred_element_type=f32) + bp_ref[...]
    m = jnp.max(logits, axis=1, keepdims=True)
    lse = jnp.log(jnp.sum(jnp.exp(logits - m), axis=1, keepdims=True)) + m
    out_ref[...] = logits - lse


# ----------------------------------------------------------------------------
# Wrapper: arrange the batch, single pallas_call over a parallel pair-block grid.
# ----------------------------------------------------------------------------
@jax.jit
def similarity_tree_lstm_forward(lx, rx, l_len, r_len, fused):
    """lx, rx: (B, T_BUCKET, EMB_DIM) padded sentence embeddings (BERT stand-in);
    l_len, r_len: (B,) int32 valid lengths.  Returns (B, NUM_CLASSES) log-probs,
    one row per sentence pair."""
    B, T, E = lx.shape
    assert T == T_BUCKET and E == EMB_DIM and B % PB == 0
    NB = B // PB

    def rev(x, ln):
        # Runtime-length time reversal; positions >= ln are never used (masked).
        idx = jnp.clip(ln[:, None] - 1 - jnp.arange(T)[None, :], 0, T - 1)
        return jnp.take_along_axis(x, idx[:, :, None], axis=1)

    def arrange(fwd, bwd):
        # (B,T,E) x2 -> (NB, T, PB, 2E): lanes [0:E]=token t, [E:2E]=reversed token t.
        z = jnp.concatenate([fwd, bwd], axis=-1).reshape(NB, PB, T, 2 * E)
        return jnp.transpose(z, (0, 2, 1, 3))

    xl = arrange(lx, rev(lx, l_len))
    xr = arrange(rx, rev(rx, r_len))
    # Per block / per step, rows [0:PB] = left sentences, [PB:2PB] = right.
    x_all = jnp.concatenate([xl, xr], axis=2)
    x_all = x_all.reshape(NB * T * RS, 2 * E).astype(jnp.bfloat16)

    lens = jnp.concatenate(
        [l_len.reshape(NB, PB), r_len.reshape(NB, PB)], axis=1
    ).reshape(NB * RS, 1).astype(jnp.int32)

    whole = pl.BlockSpec(memory_space=pltpu.MemorySpace.VMEM)  # grid-invariant weights

    out = pl.pallas_call(
        _fused_kernel,
        out_shape=jax.ShapeDtypeStruct((NB * PB, OUT_PAD), jnp.float32),
        grid=(NB,),
        in_specs=[
            pl.BlockSpec((T_BUCKET * RS, 2 * E), lambda i: (i, 0)),   # x block
            pl.BlockSpec((RS, 1), lambda i: (i, 0)),                  # lengths block
            whole, whole, whole,                                      # wih, b, whh
            whole, whole, whole, whole, whole, whole,                 # fc / similarity
        ],
        out_specs=pl.BlockSpec((PB, OUT_PAD), lambda i: (i, 0)),
        compiler_params=pltpu.CompilerParams(
            dimension_semantics=("parallel",)),   # both TensorCores on v7x
    )(x_all, lens, fused["wih"], fused["b"], fused["whh"],
      fused["wfc"], fused["bfc"], fused["wh"], fused["bh"],
      fused["wp"], fused["bp"])
    return out[:, :NUM_CLASSES]


# ----------------------------------------------------------------------------
# Parameters
# ----------------------------------------------------------------------------
def init_params(key):
    ks = jax.random.split(key, 12)

    def u(k, shape, fan_in):
        bound = 1.0 / jnp.sqrt(jnp.float32(fan_in))
        return jax.random.uniform(k, shape, jnp.float32, -bound, bound)

    H, E = HIDDEN, EMB_DIM
    return {
        # LSTM weights stored transposed (in, 4H); gate order i|f|g|o; b = b_ih+b_hh.
        "wih_f": u(ks[0], (E, 4 * H), H),
        "whh_f": u(ks[1], (H, 4 * H), H),
        "b_f":   u(ks[2], (1, 4 * H), H),
        "wih_b": u(ks[3], (E, 4 * H), H),
        "whh_b": u(ks[4], (H, 4 * H), H),
        "b_b":   u(ks[5], (1, 4 * H), H),
        # RNNLstm fc: Linear(2*dimension, 150)
        "wfc": u(ks[6], (2 * H, FC_OUT), 2 * H),
        "bfc": u(ks[7], (1, FC_OUT), 2 * H),
        # Similarity head: wh Linear(2*150, sim_hid), wp Linear(sim_hid, classes)
        "wh": u(ks[8], (2 * FC_OUT, SIM_HID), 2 * FC_OUT),
        "bh": u(ks[9], (1, SIM_HID), 2 * FC_OUT),
        "wp": u(ks[10], (SIM_HID, NUM_CLASSES), SIM_HID),
        "bp": u(ks[11], (1, NUM_CLASSES), SIM_HID),
    }


def _place_gates(w, direction):
    """Map one direction's weight (rows, 4H) with torch gate order [i|f|g|o] into
    the fused layout [i_f|i_b|f_f|f_b|g_f|g_b|o_f|o_b] (rows, 8H), zero elsewhere."""
    H = HIDDEN
    out = jnp.zeros((w.shape[0], 8 * H), jnp.float32)
    for k in range(4):
        col = (2 * k + direction) * H
        out = out.at[:, col:col + H].set(w[:, k * H:(k + 1) * H])
    return out


def fuse_params(p):
    """One-time weight prep: block-diagonal fwd/bwd stacking with gate-column
    reordering, g-gate pre-scale by 2 (single-tanh activation), bf16 MXU
    operands, lane-dense padded similarity projection."""
    H = HIDDEN
    wih = jnp.concatenate([_place_gates(p["wih_f"], 0),
                           _place_gates(p["wih_b"], 1)], axis=0)   # (2E, 8H)
    whh = jnp.concatenate([_place_gates(p["whh_f"], 0),
                           _place_gates(p["whh_b"], 1)], axis=0)   # (2H, 8H)
    b = _place_gates(p["b_f"], 0) + _place_gates(p["b_b"], 1)      # (1, 8H)

    blk = jnp.arange(8 * H) // H                                   # gate-block index 0..7
    g_scale = jnp.where((blk == 4) | (blk == 5), 2.0, 1.0).astype(jnp.float32)
    wih = wih * g_scale
    whh = whh * g_scale
    b = b * g_scale

    wp_pad = jnp.zeros((SIM_HID, OUT_PAD), jnp.float32).at[:, :NUM_CLASSES].set(p["wp"])
    bp_pad = jnp.full((1, OUT_PAD), -1e30, jnp.float32).at[:, :NUM_CLASSES].set(p["bp"])

    return {
        "wih": wih.astype(jnp.bfloat16),
        "whh": whh.astype(jnp.bfloat16),
        "b":   b,
        "wfc": p["wfc"], "bfc": p["bfc"],
        "wh":  p["wh"],  "bh":  p["bh"],
        "wp":  wp_pad,   "bp":  bp_pad,
    }


# ----------------------------------------------------------------------------
# Pure-JAX reference (f32) for validation.
# ----------------------------------------------------------------------------
@jax.jit
def reference_forward(lx, rx, l_len, r_len, p):
    H = HIDDEN

    def cell(h, c, xt, wih, whh, b):
        z = xt @ wih + h @ whh + b[0]
        i = jax.nn.sigmoid(z[0:H])
        f = jax.nn.sigmoid(z[H:2 * H])
        g = jnp.tanh(z[2 * H:3 * H])
        o = jax.nn.sigmoid(z[3 * H:4 * H])
        c2 = f * c + i * g
        return o * jnp.tanh(c2), c2

    def bilstm_feat(x, ln):
        hf = jnp.zeros(H); cf = jnp.zeros(H)
        hb = jnp.zeros(H); cb = jnp.zeros(H)
        ridx = jnp.clip(ln - 1 - jnp.arange(T_BUCKET), 0, T_BUCKET - 1)
        for t in range(T_BUCKET):
            v = t < ln
            h2, c2 = cell(hf, cf, x[t], p["wih_f"], p["whh_f"], p["b_f"])
            hf = jnp.where(v, h2, hf); cf = jnp.where(v, c2, cf)
            h2, c2 = cell(hb, cb, x[ridx[t]], p["wih_b"], p["whh_b"], p["b_b"])
            hb = jnp.where(v, h2, hb); cb = jnp.where(v, c2, cb)
        feat = jnp.concatenate([hf, hb])
        return jax.nn.sigmoid(feat @ p["wfc"] + p["bfc"][0])

    lv = jax.vmap(bilstm_feat)(lx, l_len)
    rv = jax.vmap(bilstm_feat)(rx, r_len)
    vd = jnp.concatenate([lv * rv, jnp.abs(lv - rv)], axis=1)
    hid = jax.nn.sigmoid(vd @ p["wh"] + p["bh"][0])
    logits = hid @ p["wp"] + p["bp"][0]
    return jax.nn.log_softmax(logits, axis=1)


if __name__ == "__main__":
    key = jax.random.PRNGKey(0)
    k_p, k_l, k_r, k_ll, k_rl = jax.random.split(key, 5)
    raw = init_params(k_p)
    fused = fuse_params(raw)

    B = 16  # sentence pairs per call (2 parallel grid blocks of PB=8 pairs)
    lx = jax.random.normal(k_l, (B, T_BUCKET, EMB_DIM), jnp.float32)
    rx = jax.random.normal(k_r, (B, T_BUCKET, EMB_DIM), jnp.float32)
    l_len = jax.random.randint(k_ll, (B,), 2, T_BUCKET + 1).astype(jnp.int32)
    r_len = jax.random.randint(k_rl, (B,), 2, T_BUCKET + 1).astype(jnp.int32)

    out = similarity_tree_lstm_forward(lx, rx, l_len, r_len, fused)
    jax.block_until_ready(out)

    ref = reference_forward(lx, rx, l_len, r_len, raw)
    assert out.shape == (B, NUM_CLASSES)
    err = float(jnp.max(jnp.abs(out - ref)))
    assert err < 0.1, f"kernel/reference mismatch: max abs err = {err}"
    print("KERNEL_OK")
</pallas_src>

<mosaic_0001>
module attributes {stable_mosaic.version = 11 : i64} {
  func.func @_fused_kernel(%arg0: i32, %arg1: memref<128x128xbf16, #tpu.memory_space<vmem>>, %arg2: memref<16x1xi32, #tpu.memory_space<vmem>>, %arg3: memref<128x256xbf16, #tpu.memory_space<vmem>>, %arg4: memref<1x256xf32, #tpu.memory_space<vmem>>, %arg5: memref<64x256xbf16, #tpu.memory_space<vmem>>, %arg6: memref<64x16xf32, #tpu.memory_space<vmem>>, %arg7: memref<1x16xf32, #tpu.memory_space<vmem>>, %arg8: memref<32x8xf32, #tpu.memory_space<vmem>>, %arg9: memref<1x8xf32, #tpu.memory_space<vmem>>, %arg10: memref<8x128xf32, #tpu.memory_space<vmem>>, %arg11: memref<1x128xf32, #tpu.memory_space<vmem>>, %arg12: memref<8x128xf32, #tpu.memory_space<vmem>>) attributes {dimension_semantics = [#tpu.dimension_semantics<parallel>], iteration_bounds = array<i64: 2>, scalar_prefetch = 0 : i64, scratch_operands = 0 : i64, tpu.core_type = #tpu.core_type<tc>, window_params = [{transform_indices = @transform_0, window_bounds = array<i64: 128, 128>}, {transform_indices = @transform_1, window_bounds = array<i64: 16, 1>}, {pipeline_mode = #tpu.pipeline_mode<synchronous>, transform_indices = @transform_2, window_bounds = array<i64: 128, 256>}, {pipeline_mode = #tpu.pipeline_mode<synchronous>, transform_indices = @transform_3, window_bounds = array<i64: 1, 256>}, {pipeline_mode = #tpu.pipeline_mode<synchronous>, transform_indices = @transform_4, window_bounds = array<i64: 64, 256>}, {pipeline_mode = #tpu.pipeline_mode<synchronous>, transform_indices = @transform_5, window_bounds = array<i64: 64, 16>}, {pipeline_mode = #tpu.pipeline_mode<synchronous>, transform_indices = @transform_6, window_bounds = array<i64: 1, 16>}, {pipeline_mode = #tpu.pipeline_mode<synchronous>, transform_indices = @transform_7, window_bounds = array<i64: 32, 8>}, {pipeline_mode = #tpu.pipeline_mode<synchronous>, transform_indices = @transform_8, window_bounds = array<i64: 1, 8>}, {pipeline_mode = #tpu.pipeline_mode<synchronous>, transform_indices = @transform_9, window_bounds = array<i64: 8, 128>}, {pipeline_mode = #tpu.pipeline_mode<synchronous>, transform_indices = @transform_10, window_bounds = array<i64: 1, 128>}, {transform_indices = @transform_11, window_bounds = array<i64: 8, 128>}]} {
    %c0 = arith.constant 0 : index
    %c0_0 = arith.constant 0 : index
    %0 = vector.load %arg1[%c0, %c0_0] : memref<128x128xbf16, #tpu.memory_space<vmem>>, vector<128x128xbf16>
    %c0_1 = arith.constant 0 : index
    %c0_2 = arith.constant 0 : index
    %1 = vector.load %arg3[%c0_1, %c0_2] : memref<128x256xbf16, #tpu.memory_space<vmem>>, vector<128x256xbf16>
    %cst = arith.constant dense<0.000000e+00> : vector<128x256xf32>
    %2 = tpu.matmul %0, %1, %cst {dimension_numbers = #tpu.dot_dimension_numbers<[1], [0], [0], [1], [0, 0, 1, 1], [], []>} : vector<128x128xbf16>, vector<128x256xbf16>, vector<128x256xf32> -> vector<128x256xf32>
    %c0_3 = arith.constant 0 : index
    %c0_4 = arith.constant 0 : index
    %3 = vector.load %arg4[%c0_3, %c0_4] : memref<1x256xf32, #tpu.memory_space<vmem>>, vector<1x256xf32>
    %4 = vector.broadcast %3 : vector<1x256xf32> to vector<128x256xf32>
    %5 = arith.addf %2, %4 : vector<128x256xf32>
    %c0_5 = arith.constant 0 : index
    %c0_6 = arith.constant 0 : index
    %6 = vector.load %arg2[%c0_5, %c0_6] : memref<16x1xi32, #tpu.memory_space<vmem>>, vector<16x1xi32>
    %cst_7 = arith.constant 0.000000e+00 : f32
    %7 = vector.broadcast %cst_7 : f32 to vector<16x64xf32>
    %cst_8 = arith.constant 0.000000e+00 : f32
    %8 = vector.broadcast %cst_8 : f32 to vector<16x64xf32>
    %9 = vector.extract_strided_slice %5 {offsets = [0, 0], sizes = [16, 256], strides = [1, 1]} : vector<128x256xf32> to vector<16x256xf32>
    %10 = arith.truncf %7 : vector<16x64xf32> to vector<16x64xbf16>
    %c0_9 = arith.constant 0 : index
    %c0_10 = arith.constant 0 : index
    %11 = vector.load %arg5[%c0_9, %c0_10] : memref<64x256xbf16, #tpu.memory_space<vmem>>, vector<64x256xbf16>
    %cst_11 = arith.constant dense<0.000000e+00> : vector<16x256xf32>
    %12 = tpu.matmul %10, %11, %cst_11 {dimension_numbers = #tpu.dot_dimension_numbers<[1], [0], [0], [1], [0, 0, 1, 1], [], []>} : vector<16x64xbf16>, vector<64x256xbf16>, vector<16x256xf32> -> vector<16x256xf32>
    %13 = arith.addf %9, %12 : vector<16x256xf32>
    %cst_12 = arith.constant 5.000000e-01 : f32
    %14 = vector.broadcast %cst_12 : f32 to vector<16x256xf32>
    %15 = arith.mulf %14, %13 : vector<16x256xf32>
    %16 = math.tanh %15 : vector<16x256xf32>
    %17 = vector.extract_strided_slice %16 {offsets = [0, 0], sizes = [16, 64], strides = [1, 1]} : vector<16x256xf32> to vector<16x64xf32>
    %cst_13 = arith.constant 1.000000e+00 : f32
    %18 = vector.broadcast %cst_13 : f32 to vector<16x64xf32>
    %19 = arith.addf %17, %18 : vector<16x64xf32>
    %cst_14 = arith.constant 5.000000e-01 : f32
    %20 = vector.broadcast %cst_14 : f32 to vector<16x64xf32>
    %21 = arith.mulf %20, %19 : vector<16x64xf32>
    %22 = vector.extract_strided_slice %16 {offsets = [0, 64], sizes = [16, 64], strides = [1, 1]} : vector<16x256xf32> to vector<16x64xf32>
    %cst_15 = arith.constant 1.000000e+00 : f32
    %23 = vector.broadcast %cst_15 : f32 to vector<16x64xf32>
    %24 = arith.addf %22, %23 : vector<16x64xf32>
    %cst_16 = arith.constant 5.000000e-01 : f32
    %25 = vector.broadcast %cst_16 : f32 to vector<16x64xf32>
    %26 = arith.mulf %25, %24 : vector<16x64xf32>
    %27 = vector.extract_strided_slice %16 {offsets = [0, 128], sizes = [16, 64], strides = [1, 1]} : vector<16x256xf32> to vector<16x64xf32>
    %28 = vector.extract_strided_slice %16 {offsets = [0, 192], sizes = [16, 64], strides = [1, 1]} : vector<16x256xf32> to vector<16x64xf32>
    %cst_17 = arith.constant 1.000000e+00 : f32
    %29 = vector.broadcast %cst_17 : f32 to vector<16x64xf32>
    %30 = arith.addf %28, %29 : vector<16x64xf32>
    %cst_18 = arith.constant 5.000000e-01 : f32
    %31 = vector.broadcast %cst_18 : f32 to vector<16x64xf32>
    %32 = arith.mulf %31, %30 : vector<16x64xf32>
    %33 = arith.mulf %26, %8 : vector<16x64xf32>
    %34 = arith.mulf %21, %27 : vector<16x64xf32>
    %35 = arith.addf %33, %34 : vector<16x64xf32>
    %36 = math.tanh %35 : vector<16x64xf32>
    %37 = arith.mulf %32, %36 : vector<16x64xf32>
    %c0_i32 = arith.constant 0 : i32
    %38 = vector.broadcast %c0_i32 : i32 to vector<16x1xi32>
    %39 = arith.cmpi sgt, %6, %38 : vector<16x1xi32>
    %40 = vector.shape_cast %39 : vector<16x1xi1> to vector<16x1xi1>
    %41 = vector.broadcast %40 : vector<16x1xi1> to vector<16x64xi1>
    %42 = arith.select %41, %35, %8 : vector<16x64xi1>, vector<16x64xf32>
    %43 = vector.shape_cast %39 : vector<16x1xi1> to vector<16x1xi1>
    %44 = vector.broadcast %43 : vector<16x1xi1> to vector<16x64xi1>
    %45 = arith.select %44, %37, %7 : vector<16x64xi1>, vector<16x64xf32>
    %46 = vector.extract_strided_slice %5 {offsets = [16, 0], sizes = [16, 256], strides = [1, 1]} : vector<128x256xf32> to vector<16x256xf32>
    %47 = arith.truncf %45 : vector<16x64xf32> to vector<16x64xbf16>
    %c0_19 = arith.constant 0 : index
    %c0_20 = arith.constant 0 : index
    %48 = vector.load %arg5[%c0_19, %c0_20] : memref<64x256xbf16, #tpu.memory_space<vmem>>, vector<64x256xbf16>
    %cst_21 = arith.constant dense<0.000000e+00> : vector<16x256xf32>
    %49 = tpu.matmul %47, %48, %cst_21 {dimension_numbers = #tpu.dot_dimension_numbers<[1], [0], [0], [1], [0, 0, 1, 1], [], []>} : vector<16x64xbf16>, vector<64x256xbf16>, vector<16x256xf32> -> vector<16x256xf32>
    %50 = arith.addf %46, %49 : vector<16x256xf32>
    %cst_22 = arith.constant 5.000000e-01 : f32
    %51 = vector.broadcast %cst_22 : f32 to vector<16x256xf32>
    %52 = arith.mulf %51, %50 : vector<16x256xf32>
    %53 = math.tanh %52 : vector<16x256xf32>
    %54 = vector.extract_strided_slice %53 {offsets = [0, 0], sizes = [16, 64], strides = [1, 1]} : vector<16x256xf32> to vector<16x64xf32>
    %cst_23 = arith.constant 1.000000e+00 : f32
    %55 = vector.broadcast %cst_23 : f32 to vector<16x64xf32>
    %56 = arith.addf %54, %55 : vector<16x64xf32>
    %cst_24 = arith.constant 5.000000e-01 : f32
    %57 = vector.broadcast %cst_24 : f32 to vector<16x64xf32>
    %58 = arith.mulf %57, %56 : vector<16x64xf32>
    %59 = vector.extract_strided_slice %53 {offsets = [0, 64], sizes = [16, 64], strides = [1, 1]} : vector<16x256xf32> to vector<16x64xf32>
    %cst_25 = arith.constant 1.000000e+00 : f32
    %60 = vector.broadcast %cst_25 : f32 to vector<16x64xf32>
    %61 = arith.addf %59, %60 : vector<16x64xf32>
    %cst_26 = arith.constant 5.000000e-01 : f32
    %62 = vector.broadcast %cst_26 : f32 to vector<16x64xf32>
    %63 = arith.mulf %62, %61 : vector<16x64xf32>
    %64 = vector.extract_strided_slice %53 {offsets = [0, 128], sizes = [16, 64], strides = [1, 1]} : vector<16x256xf32> to vector<16x64xf32>
    %65 = vector.extract_strided_slice %53 {offsets = [0, 192], sizes = [16, 64], strides = [1, 1]} : vector<16x256xf32> to vector<16x64xf32>
    %cst_27 = arith.constant 1.000000e+00 : f32
    %66 = vector.broadcast %cst_27 : f32 to vector<16x64xf32>
    %67 = arith.addf %65, %66 : vector<16x64xf32>
    %cst_28 = arith.constant 5.000000e-01 : f32
    %68 = vector.broadcast %cst_28 : f32 to vector<16x64xf32>
    %69 = arith.mulf %68, %67 : vector<16x64xf32>
    %70 = arith.mulf %63, %42 : vector<16x64xf32>
    %71 = arith.mulf %58, %64 : vector<16x64xf32>
    %72 = arith.addf %70, %71 : vector<16x64xf32>
    %73 = math.tanh %72 : vector<16x64xf32>
    %74 = arith.mulf %69, %73 : vector<16x64xf32>
    %c1_i32 = arith.constant 1 : i32
    %75 = vector.broadcast %c1_i32 : i32 to vector<16x1xi32>
    %76 = arith.cmpi sgt, %6, %75 : vector<16x1xi32>
    %77 = vector.shape_cast %76 : vector<16x1xi1> to vector<16x1xi1>
    %78 = vector.broadcast %77 : vector<16x1xi1> to vector<16x64xi1>
    %79 = arith.select %78, %72, %42 : vector<16x64xi1>, vector<16x64xf32>
    %80 = vector.shape_cast %76 : vector<16x1xi1> to vector<16x1xi1>
    %81 = vector.broadcast %80 : vector<16x1xi1> to vector<16x64xi1>
    %82 = arith.select %81, %74, %45 : vector<16x64xi1>, vector<16x64xf32>
    %83 = vector.extract_strided_slice %5 {offsets = [32, 0], sizes = [16, 256], strides = [1, 1]} : vector<128x256xf32> to vector<16x256xf32>
    %84 = arith.truncf %82 : vector<16x64xf32> to vector<16x64xbf16>
    %c0_29 = arith.constant 0 : index
    %c0_30 = arith.constant 0 : index
    %85 = vector.load %arg5[%c0_29, %c0_30] : memref<64x256xbf16, #tpu.memory_space<vmem>>, vector<64x256xbf16>
    %cst_31 = arith.constant dense<0.000000e+00> : vector<16x256xf32>
    %86 = tpu.matmul %84, %85, %cst_31 {dimension_numbers = #tpu.dot_dimension_numbers<[1], [0], [0], [1], [0, 0, 1, 1], [], []>} : vector<16x64xbf16>, vector<64x256xbf16>, vector<16x256xf32> -> vector<16x256xf32>
    %87 = arith.addf %83, %86 : vector<16x256xf32>
    %cst_32 = arith.constant 5.000000e-01 : f32
    %88 = vector.broadcast %cst_32 : f32 to vector<16x256xf32>
    %89 = arith.mulf %88, %87 : vector<16x256xf32>
    %90 = math.tanh %89 : vector<16x256xf32>
    %91 = vector.extract_strided_slice %90 {offsets = [0, 0], sizes = [16, 64], strides = [1, 1]} : vector<16x256xf32> to vector<16x64xf32>
    %cst_33 = arith.constant 1.000000e+00 : f32
    %92 = vector.broadcast %cst_33 : f32 to vector<16x64xf32>
    %93 = arith.addf %91, %92 : vector<16x64xf32>
    %cst_34 = arith.constant 5.000000e-01 : f32
    %94 = vector.broadcast %cst_34 : f32 to vector<16x64xf32>
    %95 = arith.mulf %94, %93 : vector<16x64xf32>
    %96 = vector.extract_strided_slice %90 {offsets = [0, 64], sizes = [16, 64], strides = [1, 1]} : vector<16x256xf32> to vector<16x64xf32>
    %cst_35 = arith.constant 1.000000e+00 : f32
    %97 = vector.broadcast %cst_35 : f32 to vector<16x64xf32>
    %98 = arith.addf %96, %97 : vector<16x64xf32>
    %cst_36 = arith.constant 5.000000e-01 : f32
    %99 = vector.broadcast %cst_36 : f32 to vector<16x64xf32>
    %100 = arith.mulf %99, %98 : vector<16x64xf32>
    %101 = vector.extract_strided_slice %90 {offsets = [0, 128], sizes = [16, 64], strides = [1, 1]} : vector<16x256xf32> to vector<16x64xf32>
    %102 = vector.extract_strided_slice %90 {offsets = [0, 192], sizes = [16, 64], strides = [1, 1]} : vector<16x256xf32> to vector<16x64xf32>
    %cst_37 = arith.constant 1.000000e+00 : f32
    %103 = vector.broadcast %cst_37 : f32 to vector<16x64xf32>
    %104 = arith.addf %102, %103 : vector<16x64xf32>
    %cst_38 = arith.constant 5.000000e-01 : f32
    %105 = vector.broadcast %cst_38 : f32 to vector<16x64xf32>
    %106 = arith.mulf %105, %104 : vector<16x64xf32>
    %107 = arith.mulf %100, %79 : vector<16x64xf32>
    %108 = arith.mulf %95, %101 : vector<16x64xf32>
    %109 = arith.addf %107, %108 : vector<16x64xf32>
    %110 = math.tanh %109 : vector<16x64xf32>
    %111 = arith.mulf %106, %110 : vector<16x64xf32>
    %c2_i32 = arith.constant 2 : i32
    %112 = vector.broadcast %c2_i32 : i32 to vector<16x1xi32>
    %113 = arith.cmpi sgt, %6, %112 : vector<16x1xi32>
    %114 = vector.shape_cast %113 : vector<16x1xi1> to vector<16x1xi1>
    %115 = vector.broadcast %114 : vector<16x1xi1> to vector<16x64xi1>
    %116 = arith.select %115, %109, %79 : vector<16x64xi1>, vector<16x64xf32>
    %117 = vector.shape_cast %113 : vector<16x1xi1> to vector<16x1xi1>
    %118 = vector.broadcast %117 : vector<16x1xi1> to vector<16x64xi1>
    %119 = arith.select %118, %111, %82 : vector<16x64xi1>, vector<16x64xf32>
    %120 = vector.extract_strided_slice %5 {offsets = [48, 0], sizes = [16, 256], strides = [1, 1]} : vector<128x256xf32> to vector<16x256xf32>
    %121 = arith.truncf %119 : vector<16x64xf32> to vector<16x64xbf16>
    %c0_39 = arith.constant 0 : index
    %c0_40 = arith.constant 0 : index
    %122 = vector.load %arg5[%c0_39, %c0_40] : memref<64x256xbf16, #tpu.memory_space<vmem>>, vector<64x256xbf16>
    %cst_41 = arith.constant dense<0.000000e+00> : vector<16x256xf32>
    %123 = tpu.matmul %121, %122, %cst_41 {dimension_numbers = #tpu.dot_dimension_numbers<[1], [0], [0], [1], [0, 0, 1, 1], [], []>} : vector<16x64xbf16>, vector<64x256xbf16>, vector<16x256xf32> -> vector<16x256xf32>
    %124 = arith.addf %120, %123 : vector<16x256xf32>
    %cst_42 = arith.constant 5.000000e-01 : f32
    %125 = vector.broadcast %cst_42 : f32 to vector<16x256xf32>
    %126 = arith.mulf %125, %124 : vector<16x256xf32>
    %127 = math.tanh %126 : vector<16x256xf32>
    %128 = vector.extract_strided_slice %127 {offsets = [0, 0], sizes = [16, 64], strides = [1, 1]} : vector<16x256xf32> to vector<16x64xf32>
    %cst_43 = arith.constant 1.000000e+00 : f32
    %129 = vector.broadcast %cst_43 : f32 to vector<16x64xf32>
    %130 = arith.addf %128, %129 : vector<16x64xf32>
    %cst_44 = arith.constant 5.000000e-01 : f32
    %131 = vector.broadcast %cst_44 : f32 to vector<16x64xf32>
    %132 = arith.mulf %131, %130 : vector<16x64xf32>
    %133 = vector.extract_strided_slice %127 {offsets = [0, 64], sizes = [16, 64], strides = [1, 1]} : vector<16x256xf32> to vector<16x64xf32>
    %cst_45 = arith.constant 1.000000e+00 : f32
    %134 = vector.broadcast %cst_45 : f32 to vector<16x64xf32>
    %135 = arith.addf %133, %134 : vector<16x64xf32>
    %cst_46 = arith.constant 5.000000e-01 : f32
    %136 = vector.broadcast %cst_46 : f32 to vector<16x64xf32>
    %137 = arith.mulf %136, %135 : vector<16x64xf32>
    %138 = vector.extract_strided_slice %127 {offsets = [0, 128], sizes = [16, 64], strides = [1, 1]} : vector<16x256xf32> to vector<16x64xf32>
    %139 = vector.extract_strided_slice %127 {offsets = [0, 192], sizes = [16, 64], strides = [1, 1]} : vector<16x256xf32> to vector<16x64xf32>
    %cst_47 = arith.constant 1.000000e+00 : f32
    %140 = vector.broadcast %cst_47 : f32 to vector<16x64xf32>
    %141 = arith.addf %139, %140 : vector<16x64xf32>
    %cst_48 = arith.constant 5.000000e-01 : f32
    %142 = vector.broadcast %cst_48 : f32 to vector<16x64xf32>
    %143 = arith.mulf %142, %141 : vector<16x64xf32>
    %144 = arith.mulf %137, %116 : vector<16x64xf32>
    %145 = arith.mulf %132, %138 : vector<16x64xf32>
    %146 = arith.addf %144, %145 : vector<16x64xf32>
    %147 = math.tanh %146 : vector<16x64xf32>
    %148 = arith.mulf %143, %147 : vector<16x64xf32>
    %c3_i32 = arith.constant 3 : i32
    %149 = vector.broadcast %c3_i32 : i32 to vector<16x1xi32>
    %150 = arith.cmpi sgt, %6, %149 : vector<16x1xi32>
    %151 = vector.shape_cast %150 : vector<16x1xi1> to vector<16x1xi1>
    %152 = vector.broadcast %151 : vector<16x1xi1> to vector<16x64xi1>
    %153 = arith.select %152, %146, %116 : vector<16x64xi1>, vector<16x64xf32>
    %154 = vector.shape_cast %150 : vector<16x1xi1> to vector<16x1xi1>
    %155 = vector.broadcast %154 : vector<16x1xi1> to vector<16x64xi1>
    %156 = arith.select %155, %148, %119 : vector<16x64xi1>, vector<16x64xf32>
    %157 = vector.extract_strided_slice %5 {offsets = [64, 0], sizes = [16, 256], strides = [1, 1]} : vector<128x256xf32> to vector<16x256xf32>
    %158 = arith.truncf %156 : vector<16x64xf32> to vector<16x64xbf16>
    %c0_49 = arith.constant 0 : index
    %c0_50 = arith.constant 0 : index
    %159 = vector.load %arg5[%c0_49, %c0_50] : memref<64x256xbf16, #tpu.memory_space<vmem>>, vector<64x256xbf16>
    %cst_51 = arith.constant dense<0.000000e+00> : vector<16x256xf32>
    %160 = tpu.matmul %158, %159, %cst_51 {dimension_numbers = #tpu.dot_dimension_numbers<[1], [0], [0], [1], [0, 0, 1, 1], [], []>} : vector<16x64xbf16>, vector<64x256xbf16>, vector<16x256xf32> -> vector<16x256xf32>
    %161 = arith.addf %157, %160 : vector<16x256xf32>
    %cst_52 = arith.constant 5.000000e-01 : f32
    %162 = vector.broadcast %cst_52 : f32 to vector<16x256xf32>
    %163 = arith.mulf %162, %161 : vector<16x256xf32>
    %164 = math.tanh %163 : vector<16x256xf32>
    %165 = vector.extract_strided_slice %164 {offsets = [0, 0], sizes = [16, 64], strides = [1, 1]} : vector<16x256xf32> to vector<16x64xf32>
    %cst_53 = arith.constant 1.000000e+00 : f32
    %166 = vector.broadcast %cst_53 : f32 to vector<16x64xf32>
    %167 = arith.addf %165, %166 : vector<16x64xf32>
    %cst_54 = arith.constant 5.000000e-01 : f32
    %168 = vector.broadcast %cst_54 : f32 to vector<16x64xf32>
    %169 = arith.mulf %168, %167 : vector<16x64xf32>
    %170 = vector.extract_strided_slice %164 {offsets = [0, 64], sizes = [16, 64], strides = [1, 1]} : vector<16x256xf32> to vector<16x64xf32>
    %cst_55 = arith.constant 1.000000e+00 : f32
    %171 = vector.broadcast %cst_55 : f32 to vector<16x64xf32>
    %172 = arith.addf %170, %171 : vector<16x64xf32>
    %cst_56 = arith.constant 5.000000e-01 : f32
    %173 = vector.broadcast %cst_56 : f32 to vector<16x64xf32>
    %174 = arith.mulf %173, %172 : vector<16x64xf32>
    %175 = vector.extract_strided_slice %164 {offsets = [0, 128], sizes = [16, 64], strides = [1, 1]} : vector<16x256xf32> to vector<16x64xf32>
    %176 = vector.extract_strided_slice %164 {offsets = [0, 192], sizes = [16, 64], strides = [1, 1]} : vector<16x256xf32> to vector<16x64xf32>
    %cst_57 = arith.constant 1.000000e+00 : f32
    %177 = vector.broadcast %cst_57 : f32 to vector<16x64xf32>
    %178 = arith.addf %176, %177 : vector<16x64xf32>
    %cst_58 = arith.constant 5.000000e-01 : f32
    %179 = vector.broadcast %cst_58 : f32 to vector<16x64xf32>
    %180 = arith.mulf %179, %178 : vector<16x64xf32>
    %181 = arith.mulf %174, %153 : vector<16x64xf32>
    %182 = arith.mulf %169, %175 : vector<16x64xf32>
    %183 = arith.addf %181, %182 : vector<16x64xf32>
    %184 = math.tanh %183 : vector<16x64xf32>
    %185 = arith.mulf %180, %184 : vector<16x64xf32>
    %c4_i32 = arith.constant 4 : i32
    %186 = vector.broadcast %c4_i32 : i32 to vector<16x1xi32>
    %187 = arith.cmpi sgt, %6, %186 : vector<16x1xi32>
    %188 = vector.shape_cast %187 : vector<16x1xi1> to vector<16x1xi1>
    %189 = vector.broadcast %188 : vector<16x1xi1> to vector<16x64xi1>
    %190 = arith.select %189, %183, %153 : vector<16x64xi1>, vector<16x64xf32>
    %191 = vector.shape_cast %187 : vector<16x1xi1> to vector<16x1xi1>
    %192 = vector.broadcast %191 : vector<16x1xi1> to vector<16x64xi1>
    %193 = arith.select %192, %185, %156 : vector<16x64xi1>, vector<16x64xf32>
    %194 = vector.extract_strided_slice %5 {offsets = [80, 0], sizes = [16, 256], strides = [1, 1]} : vector<128x256xf32> to vector<16x256xf32>
    %195 = arith.truncf %193 : vector<16x64xf32> to vector<16x64xbf16>
    %c0_59 = arith.constant 0 : index
    %c0_60 = arith.constant 0 : index
    %196 = vector.load %arg5[%c0_59, %c0_60] : memref<64x256xbf16, #tpu.memory_space<vmem>>, vector<64x256xbf16>
    %cst_61 = arith.constant dense<0.000000e+00> : vector<16x256xf32>
    %197 = tpu.matmul %195, %196, %cst_61 {dimension_numbers = #tpu.dot_dimension_numbers<[1], [0], [0], [1], [0, 0, 1, 1], [], []>} : vector<16x64xbf16>, vector<64x256xbf16>, vector<16x256xf32> -> vector<16x256xf32>
    %198 = arith.addf %194, %197 : vector<16x256xf32>
    %cst_62 = arith.constant 5.000000e-01 : f32
    %199 = vector.broadcast %cst_62 : f32 to vector<16x256xf32>
    %200 = arith.mulf %199, %198 : vector<16x256xf32>
    %201 = math.tanh %200 : vector<16x256xf32>
    %202 = vector.extract_strided_slice %201 {offsets = [0, 0], sizes = [16, 64], strides = [1, 1]} : vector<16x256xf32> to vector<16x64xf32>
    %cst_63 = arith.constant 1.000000e+00 : f32
    %203 = vector.broadcast %cst_63 : f32 to vector<16x64xf32>
    %204 = arith.addf %202, %203 : vector<16x64xf32>
    %cst_64 = arith.constant 5.000000e-01 : f32
    %205 = vector.broadcast %cst_64 : f32 to vector<16x64xf32>
    %206 = arith.mulf %205, %204 : vector<16x64xf32>
    %207 = vector.extract_strided_slice %201 {offsets = [0, 64], sizes = [16, 64], strides = [1, 1]} : vector<16x256xf32> to vector<16x64xf32>
    %cst_65 = arith.constant 1.000000e+00 : f32
    %208 = vector.broadcast %cst_65 : f32 to vector<16x64xf32>
    %209 = arith.addf %207, %208 : vector<16x64xf32>
    %cst_66 = arith.constant 5.000000e-01 : f32
    %210 = vector.broadcast %cst_66 : f32 to vector<16x64xf32>
    %211 = arith.mulf %210, %209 : vector<16x64xf32>
    %212 = vector.extract_strided_slice %201 {offsets = [0, 128], sizes = [16, 64], strides = [1, 1]} : vector<16x256xf32> to vector<16x64xf32>
    %213 = vector.extract_strided_slice %201 {offsets = [0, 192], sizes = [16, 64], strides = [1, 1]} : vector<16x256xf32> to vector<16x64xf32>
    %cst_67 = arith.constant 1.000000e+00 : f32
    %214 = vector.broadcast %cst_67 : f32 to vector<16x64xf32>
    %215 = arith.addf %213, %214 : vector<16x64xf32>
    %cst_68 = arith.constant 5.000000e-01 : f32
    %216 = vector.broadcast %cst_68 : f32 to vector<16x64xf32>
    %217 = arith.mulf %216, %215 : vector<16x64xf32>
    %218 = arith.mulf %211, %190 : vector<16x64xf32>
    %219 = arith.mulf %206, %212 : vector<16x64xf32>
    %220 = arith.addf %218, %219 : vector<16x64xf32>
    %221 = math.tanh %220 : vector<16x64xf32>
    %222 = arith.mulf %217, %221 : vector<16x64xf32>
    %c5_i32 = arith.constant 5 : i32
    %223 = vector.broadcast %c5_i32 : i32 to vector<16x1xi32>
    %224 = arith.cmpi sgt, %6, %223 : vector<16x1xi32>
    %225 = vector.shape_cast %224 : vector<16x1xi1> to vector<16x1xi1>
    %226 = vector.broadcast %225 : vector<16x1xi1> to vector<16x64xi1>
    %227 = arith.select %226, %220, %190 : vector<16x64xi1>, vector<16x64xf32>
    %228 = vector.shape_cast %224 : vector<16x1xi1> to vector<16x1xi1>
    %229 = vector.broadcast %228 : vector<16x1xi1> to vector<16x64xi1>
    %230 = arith.select %229, %222, %193 : vector<16x64xi1>, vector<16x64xf32>
    %231 = vector.extract_strided_slice %5 {offsets = [96, 0], sizes = [16, 256], strides = [1, 1]} : vector<128x256xf32> to vector<16x256xf32>
    %232 = arith.truncf %230 : vector<16x64xf32> to vector<16x64xbf16>
    %c0_69 = arith.constant 0 : index
    %c0_70 = arith.constant 0 : index
    %233 = vector.load %arg5[%c0_69, %c0_70] : memref<64x256xbf16, #tpu.memory_space<vmem>>, vector<64x256xbf16>
    %cst_71 = arith.constant dense<0.000000e+00> : vector<16x256xf32>
    %234 = tpu.matmul %232, %233, %cst_71 {dimension_numbers = #tpu.dot_dimension_numbers<[1], [0], [0], [1], [0, 0, 1, 1], [], []>} : vector<16x64xbf16>, vector<64x256xbf16>, vector<16x256xf32> -> vector<16x256xf32>
    %235 = arith.addf %231, %234 : vector<16x256xf32>
    %cst_72 = arith.constant 5.000000e-01 : f32
    %236 = vector.broadcast %cst_72 : f32 to vector<16x256xf32>
    %237 = arith.mulf %236, %235 : vector<16x256xf32>
    %238 = math.tanh %237 : vector<16x256xf32>
    %239 = vector.extract_strided_slice %238 {offsets = [0, 0], sizes = [16, 64], strides = [1, 1]} : vector<16x256xf32> to vector<16x64xf32>
    %cst_73 = arith.constant 1.000000e+00 : f32
    %240 = vector.broadcast %cst_73 : f32 to vector<16x64xf32>
    %241 = arith.addf %239, %240 : vector<16x64xf32>
    %cst_74 = arith.constant 5.000000e-01 : f32
    %242 = vector.broadcast %cst_74 : f32 to vector<16x64xf32>
    %243 = arith.mulf %242, %241 : vector<16x64xf32>
    %244 = vector.extract_strided_slice %238 {offsets = [0, 64], sizes = [16, 64], strides = [1, 1]} : vector<16x256xf32> to vector<16x64xf32>
    %cst_75 = arith.constant 1.000000e+00 : f32
    %245 = vector.broadcast %cst_75 : f32 to vector<16x64xf32>
    %246 = arith.addf %244, %245 : vector<16x64xf32>
    %cst_76 = arith.constant 5.000000e-01 : f32
    %247 = vector.broadcast %cst_76 : f32 to vector<16x64xf32>
    %248 = arith.mulf %247, %246 : vector<16x64xf32>
    %249 = vector.extract_strided_slice %238 {offsets = [0, 128], sizes = [16, 64], strides = [1, 1]} : vector<16x256xf32> to vector<16x64xf32>
    %250 = vector.extract_strided_slice %238 {offsets = [0, 192], sizes = [16, 64], strides = [1, 1]} : vector<16x256xf32> to vector<16x64xf32>
    %cst_77 = arith.constant 1.000000e+00 : f32
    %251 = vector.broadcast %cst_77 : f32 to vector<16x64xf32>
    %252 = arith.addf %250, %251 : vector<16x64xf32>
    %cst_78 = arith.constant 5.000000e-01 : f32
    %253 = vector.broadcast %cst_78 : f32 to vector<16x64xf32>
    %254 = arith.mulf %253, %252 : vector<16x64xf32>
    %255 = arith.mulf %248, %227 : vector<16x64xf32>
    %256 = arith.mulf %243, %249 : vector<16x64xf32>
    %257 = arith.addf %255, %256 : vector<16x64xf32>
    %258 = math.tanh %257 : vector<16x64xf32>
    %259 = arith.mulf %254, %258 : vector<16x64xf32>
    %c6_i32 = arith.constant 6 : i32
    %260 = vector.broadcast %c6_i32 : i32 to vector<16x1xi32>
    %261 = arith.cmpi sgt, %6, %260 : vector<16x1xi32>
    %262 = vector.shape_cast %261 : vector<16x1xi1> to vector<16x1xi1>
    %263 = vector.broadcast %262 : vector<16x1xi1> to vector<16x64xi1>
    %264 = arith.select %263, %257, %227 : vector<16x64xi1>, vector<16x64xf32>
    %265 = vector.shape_cast %261 : vector<16x1xi1> to vector<16x1xi1>
    %266 = vector.broadcast %265 : vector<16x1xi1> to vector<16x64xi1>
    %267 = arith.select %266, %259, %230 : vector<16x64xi1>, vector<16x64xf32>
    %268 = vector.extract_strided_slice %5 {offsets = [112, 0], sizes = [16, 256], strides = [1, 1]} : vector<128x256xf32> to vector<16x256xf32>
    %269 = arith.truncf %267 : vector<16x64xf32> to vector<16x64xbf16>
    %c0_79 = arith.constant 0 : index
    %c0_80 = arith.constant 0 : index
    %270 = vector.load %arg5[%c0_79, %c0_80] : memref<64x256xbf16, #tpu.memory_space<vmem>>, vector<64x256xbf16>
    %cst_81 = arith.constant dense<0.000000e+00> : vector<16x256xf32>
    %271 = tpu.matmul %269, %270, %cst_81 {dimension_numbers = #tpu.dot_dimension_numbers<[1], [0], [0], [1], [0, 0, 1, 1], [], []>} : vector<16x64xbf16>, vector<64x256xbf16>, vector<16x256xf32> -> vector<16x256xf32>
    %272 = arith.addf %268, %271 : vector<16x256xf32>
    %cst_82 = arith.constant 5.000000e-01 : f32
    %273 = vector.broadcast %cst_82 : f32 to vector<16x256xf32>
    %274 = arith.mulf %273, %272 : vector<16x256xf32>
    %275 = math.tanh %274 : vector<16x256xf32>
    %276 = vector.extract_strided_slice %275 {offsets = [0, 0], sizes = [16, 64], strides = [1, 1]} : vector<16x256xf32> to vector<16x64xf32>
    %cst_83 = arith.constant 1.000000e+00 : f32
    %277 = vector.broadcast %cst_83 : f32 to vector<16x64xf32>
    %278 = arith.addf %276, %277 : vector<16x64xf32>
    %cst_84 = arith.constant 5.000000e-01 : f32
    %279 = vector.broadcast %cst_84 : f32 to vector<16x64xf32>
    %280 = arith.mulf %279, %278 : vector<16x64xf32>
    %281 = vector.extract_strided_slice %275 {offsets = [0, 64], sizes = [16, 64], strides = [1, 1]} : vector<16x256xf32> to vector<16x64xf32>
    %cst_85 = arith.constant 1.000000e+00 : f32
    %282 = vector.broadcast %cst_85 : f32 to vector<16x64xf32>
    %283 = arith.addf %281, %282 : vector<16x64xf32>
    %cst_86 = arith.constant 5.000000e-01 : f32
    %284 = vector.broadcast %cst_86 : f32 to vector<16x64xf32>
    %285 = arith.mulf %284, %283 : vector<16x64xf32>
    %286 = vector.extract_strided_slice %275 {offsets = [0, 128], sizes = [16, 64], strides = [1, 1]} : vector<16x256xf32> to vector<16x64xf32>
    %287 = vector.extract_strided_slice %275 {offsets = [0, 192], sizes = [16, 64], strides = [1, 1]} : vector<16x256xf32> to vector<16x64xf32>
    %cst_87 = arith.constant 1.000000e+00 : f32
    %288 = vector.broadcast %cst_87 : f32 to vector<16x64xf32>
    %289 = arith.addf %287, %288 : vector<16x64xf32>
    %cst_88 = arith.constant 5.000000e-01 : f32
    %290 = vector.broadcast %cst_88 : f32 to vector<16x64xf32>
    %291 = arith.mulf %290, %289 : vector<16x64xf32>
    %292 = arith.mulf %285, %264 : vector<16x64xf32>
    %293 = arith.mulf %280, %286 : vector<16x64xf32>
    %294 = arith.addf %292, %293 : vector<16x64xf32>
    %295 = math.tanh %294 : vector<16x64xf32>
    %296 = arith.mulf %291, %295 : vector<16x64xf32>
    %c7_i32 = arith.constant 7 : i32
    %297 = vector.broadcast %c7_i32 : i32 to vector<16x1xi32>
    %298 = arith.cmpi sgt, %6, %297 : vector<16x1xi32>
    %299 = vector.shape_cast %298 : vector<16x1xi1> to vector<16x1xi1>
    %300 = vector.broadcast %299 : vector<16x1xi1> to vector<16x64xi1>
    %301 = arith.select %300, %296, %267 : vector<16x64xi1>, vector<16x64xf32>
    %c0_89 = arith.constant 0 : index
    %c0_90 = arith.constant 0 : index
    %302 = vector.load %arg6[%c0_89, %c0_90] : memref<64x16xf32, #tpu.memory_space<vmem>>, vector<64x16xf32>
    %cst_91 = arith.constant dense<0.000000e+00> : vector<16x16xf32>
    %303 = tpu.matmul %301, %302, %cst_91 {dimension_numbers = #tpu.dot_dimension_numbers<[1], [0], [0], [1], [0, 0, 1, 1], [], []>} : vector<16x64xf32>, vector<64x16xf32>, vector<16x16xf32> -> vector<16x16xf32>
    %c0_92 = arith.constant 0 : index
    %c0_93 = arith.constant 0 : index
    %304 = vector.load %arg7[%c0_92, %c0_93] : memref<1x16xf32, #tpu.memory_space<vmem>>, vector<1x16xf32>
    %305 = vector.broadcast %304 : vector<1x16xf32> to vector<16x16xf32>
    %306 = arith.addf %303, %305 : vector<16x16xf32>
    %307 = arith.negf %306 : vector<16x16xf32>
    %308 = math.exp %307 : vector<16x16xf32>
    %cst_94 = arith.constant 1.000000e+00 : f32
    %309 = vector.broadcast %cst_94 : f32 to vector<16x16xf32>
    %310 = arith.addf %309, %308 : vector<16x16xf32>
    %311 = arith.divf %309, %310 : vector<16x16xf32>
    %312 = vector.extract_strided_slice %311 {offsets = [0, 0], sizes = [8, 16], strides = [1, 1]} : vector<16x16xf32> to vector<8x16xf32>
    %313 = vector.extract_strided_slice %311 {offsets = [8, 0], sizes = [8, 16], strides = [1, 1]} : vector<16x16xf32> to vector<8x16xf32>
    %314 = arith.mulf %312, %313 : vector<8x16xf32>
    %315 = arith.subf %312, %313 : vector<8x16xf32>
    %316 = math.absf %315 : vector<8x16xf32>
    %317 = tpu.concatenate %314, %316 in 1 : vector<8x16xf32>, vector<8x16xf32> -> vector<8x32xf32>
    %c0_95 = arith.constant 0 : index
    %c0_96 = arith.constant 0 : index
    %318 = vector.load %arg8[%c0_95, %c0_96] : memref<32x8xf32, #tpu.memory_space<vmem>>, vector<32x8xf32>
    %cst_97 = arith.constant dense<0.000000e+00> : vector<8x8xf32>
    %319 = tpu.matmul %317, %318, %cst_97 {dimension_numbers = #tpu.dot_dimension_numbers<[1], [0], [0], [1], [0, 0, 1, 1], [], []>} : vector<8x32xf32>, vector<32x8xf32>, vector<8x8xf32> -> vector<8x8xf32>
    %c0_98 = arith.constant 0 : index
    %c0_99 = arith.constant 0 : index
    %320 = vector.load %arg9[%c0_98, %c0_99] : memref<1x8xf32, #tpu.memory_space<vmem>>, vector<1x8xf32>
    %321 = vector.broadcast %320 : vector<1x8xf32> to vector<8x8xf32>
    %322 = arith.addf %319, %321 : vector<8x8xf32>
    %323 = arith.negf %322 : vector<8x8xf32>
    %324 = math.exp %323 : vector<8x8xf32>
    %cst_100 = arith.constant 1.000000e+00 : f32
    %325 = vector.broadcast %cst_100 : f32 to vector<8x8xf32>
    %326 = arith.addf %325, %324 : vector<8x8xf32>
    %327 = arith.divf %325, %326 : vector<8x8xf32>
    %c0_101 = arith.constant 0 : index
    %c0_102 = arith.constant 0 : index
    %328 = vector.load %arg10[%c0_101, %c0_102] : memref<8x128xf32, #tpu.memory_space<vmem>>, vector<8x128xf32>
    %cst_103 = arith.constant dense<0.000000e+00> : vector<8x128xf32>
    %329 = tpu.matmul %327, %328, %cst_103 {dimension_numbers = #tpu.dot_dimension_numbers<[1], [0], [0], [1], [0, 0, 1, 1], [], []>} : vector<8x8xf32>, vector<8x128xf32>, vector<8x128xf32> -> vector<8x128xf32>
    %c0_104 = arith.constant 0 : index
    %c0_105 = arith.constant 0 : index
    %330 = vector.load %arg11[%c0_104, %c0_105] : memref<1x128xf32, #tpu.memory_space<vmem>>, vector<1x128xf32>
    %331 = vector.broadcast %330 : vector<1x128xf32> to vector<8x128xf32>
    %332 = arith.addf %329, %331 : vector<8x128xf32>
    %cst_106 = arith.constant dense<0xFF800000> : vector<8xf32>
    %333 = vector.multi_reduction <maximumf>, %332, %cst_106 [1] : vector<8x128xf32> to vector<8xf32>
    %334 = vector.shape_cast %333 : vector<8xf32> to vector<8x1xf32>
    %335 = vector.broadcast %334 : vector<8x1xf32> to vector<8x128xf32>
    %336 = arith.subf %332, %335 : vector<8x128xf32>
    %337 = math.exp %336 : vector<8x128xf32>
    %cst_107 = arith.constant dense<0.000000e+00> : vector<8xf32>
    %338 = vector.multi_reduction <add>, %337, %cst_107 [1] : vector<8x128xf32> to vector<8xf32>
    %339 = vector.shape_cast %338 : vector<8xf32> to vector<8x1xf32>
    %340 = math.log %339 : vector<8x1xf32>
    %341 = arith.addf %340, %334 : vector<8x1xf32>
    %342 = vector.broadcast %341 : vector<8x1xf32> to vector<8x128xf32>
    %343 = arith.subf %332, %342 : vector<8x128xf32>
    %c0_108 = arith.constant 0 : index
    %c0_109 = arith.constant 0 : index
    %344 = vector.load %arg12[%c0_108, %c0_109] : memref<8x128xf32, #tpu.memory_space<vmem>>, vector<8x128xf32>
    tpu.vector_store %arg12[%c0_108, %c0_109], %343 {strides = array<i32>} : memref<8x128xf32, #tpu.memory_space<vmem>>, vector<8x128xf32>,
    return
  }
  func.func @transform_0(%arg0: i32) -> (i32, i32) {
    %c0_i32 = arith.constant 0 : i32
    %c0_i32_0 = arith.constant 0 : i32
    return %arg0, %c0_i32 : i32, i32
  }
  func.func @transform_1(%arg0: i32) -> (i32, i32) {
    %c0_i32 = arith.constant 0 : i32
    %c0_i32_0 = arith.constant 0 : i32
    return %arg0, %c0_i32 : i32, i32
  }
  func.func @transform_2(%arg0: i32) -> (i32, i32) {
    %c0_i32 = arith.constant 0 : i32
    %c0_i32_0 = arith.constant 0 : i32
    %c0_i32_1 = arith.constant 0 : i32
    return %c0_i32, %c0_i32_0 : i32, i32
  }
  func.func @transform_3(%arg0: i32) -> (i32, i32) {
    %c0_i32 = arith.constant 0 : i32
    %c0_i32_0 = arith.constant 0 : i32
    %c0_i32_1 = arith.constant 0 : i32
    return %c0_i32, %c0_i32_0 : i32, i32
  }
  func.func @transform_4(%arg0: i32) -> (i32, i32) {
    %c0_i32 = arith.constant 0 : i32
    %c0_i32_0 = arith.constant 0 : i32
    %c0_i32_1 = arith.constant 0 : i32
    return %c0_i32, %c0_i32_0 : i32, i32
  }
  func.func @transform_5(%arg0: i32) -> (i32, i32) {
    %c0_i32 = arith.constant 0 : i32
    %c0_i32_0 = arith.constant 0 : i32
    %c0_i32_1 = arith.constant 0 : i32
    return %c0_i32, %c0_i32_0 : i32, i32
  }
  func.func @transform_6(%arg0: i32) -> (i32, i32) {
    %c0_i32 = arith.constant 0 : i32
    %c0_i32_0 = arith.constant 0 : i32
    %c0_i32_1 = arith.constant 0 : i32
    return %c0_i32, %c0_i32_0 : i32, i32
  }
  func.func @transform_7(%arg0: i32) -> (i32, i32) {
    %c0_i32 = arith.constant 0 : i32
    %c0_i32_0 = arith.constant 0 : i32
    %c0_i32_1 = arith.constant 0 : i32
    return %c0_i32, %c0_i32_0 : i32, i32
  }
  func.func @transform_8(%arg0: i32) -> (i32, i32) {
    %c0_i32 = arith.constant 0 : i32
    %c0_i32_0 = arith.constant 0 : i32
    %c0_i32_1 = arith.constant 0 : i32
    return %c0_i32, %c0_i32_0 : i32, i32
  }
  func.func @transform_9(%arg0: i32) -> (i32, i32) {
    %c0_i32 = arith.constant 0 : i32
    %c0_i32_0 = arith.constant 0 : i32
    %c0_i32_1 = arith.constant 0 : i32
    return %c0_i32, %c0_i32_0 : i32, i32
  }
  func.func @transform_10(%arg0: i32) -> (i32, i32) {
    %c0_i32 = arith.constant 0 : i32
    %c0_i32_0 = arith.constant 0 : i32
    %c0_i32_1 = arith.constant 0 : i32
    return %c0_i32, %c0_i32_0 : i32, i32
  }
  func.func @transform_11(%arg0: i32) -> (i32, i32) {
    %c0_i32 = arith.constant 0 : i32
    %c0_i32_0 = arith.constant 0 : i32
    return %arg0, %c0_i32 : i32, i32
  }
}

</mosaic_0001>

<llo_original>
// kernel: similarity_tree_lstm_forward.1
$region0: #{similarity_tree_lstm_forward.1}
  #allocation0 [shape = 'u32[]', space=smem, size = 0x4, offset = 0x4, fixed_abs, tag = 'smem constant byte address 0x4 - core index']
  #allocation1 [shape = 'u32[72,128]{1,0:T(1,128)}', space=vmem, size = 0x9000, scoped, tag = 'internal scratch']
  %s0 = inlined_call_operand.vmem [shape: bf16[256,128], index: 0, kind: input, shape index: {}]
  %s1 = inlined_call_operand.vmem [shape: s32[32,1], index: 1, kind: input, shape index: {}]
  %s2 = inlined_call_operand.vmem [shape: bf16[128,256], index: 2, kind: input, shape index: {}]
  %s3 = inlined_call_operand.vmem [shape: f32[1,256], index: 3, kind: input, shape index: {}]
  %s4 = inlined_call_operand.vmem [shape: bf16[64,256], index: 4, kind: input, shape index: {}]
  %s5 = inlined_call_operand.vmem [shape: f32[64,16], index: 5, kind: input, shape index: {}]
  %s6 = inlined_call_operand.vmem [shape: f32[1,16], index: 6, kind: input, shape index: {}]
  %s7 = inlined_call_operand.vmem [shape: f32[32,8], index: 7, kind: input, shape index: {}]
  %s8 = inlined_call_operand.vmem [shape: f32[1,8], index: 8, kind: input, shape index: {}]
  %s9 = inlined_call_operand.vmem [shape: f32[8,128], index: 9, kind: input, shape index: {}]
  %s10 = inlined_call_operand.vmem [shape: f32[1,128], index: 10, kind: input, shape index: {}]
  %s11 = inlined_call_operand.vmem [shape: f32[16,128], index: 11, kind: output, shape index: {}]
  %s12 = sld [smem:[#allocation0]]
  $region77: #{similarity_tree_lstm_forward.1} parent=0
    _
  %s14 = ssub.s32 1, %s12
  %s15 = scalar_select 0, %s14, %s12
  loop: start=0, step=1, limit=4
  $region2: #{similarity_tree_lstm_forward.1} parent=0 // loop_pre_header
    _
  $region3: #{similarity_tree_lstm_forward.1} parent=0 // loop_header
    %s17 = sphi 0, %s21
    %p18 = scmp.ge.s32.totalorder %s17, 4
    %s27 = sphi 0, %s29
    %s30 = sphi 0, %s27
    %s31 = sphi 0, %s30
    %s47 = sphi 0, %s31
    %s53 = sphi 0, %s55
    %s56 = sphi 0, %s53
    %s57 = sphi 0, %s56
    %s73 = sphi 0, %s57
    %s77 = sphi 0, %s77
    %s79 = sphi 0, %s77
    %s80 = sphi 0, %s79
    %s94 = sphi 0, %s80
    %s98 = sphi 0, %s98
    %s100 = sphi 0, %s98
    %s101 = sphi 0, %s100
    %s115 = sphi 0, %s101
    %s119 = sphi 0, %s119
    %s121 = sphi 0, %s119
    %s122 = sphi 0, %s121
    %s136 = sphi 0, %s122
    %s140 = sphi 0, %s140
    %s142 = sphi 0, %s140
    %s143 = sphi 0, %s142
    %s157 = sphi 0, %s143
    %s161 = sphi 0, %s161
    %s163 = sphi 0, %s161
    %s164 = sphi 0, %s163
    %s178 = sphi 0, %s164
    %s182 = sphi 0, %s182
    %s184 = sphi 0, %s182
    %s185 = sphi 0, %s184
    %s199 = sphi 0, %s185
    %s203 = sphi 0, %s203
    %s205 = sphi 0, %s203
    %s206 = sphi 0, %s205
    %s220 = sphi 0, %s206
    %s224 = sphi 0, %s224
    %s226 = sphi 0, %s224
    %s227 = sphi 0, %s226
    %s241 = sphi 0, %s227
    %s245 = sphi 0, %s245
    %s247 = sphi 0, %s245
    %s248 = sphi 0, %s247
    %s262 = sphi 0, %s248
    %s268 = sphi 0, %s270
    %s271 = sphi 0, %s268
    %s272 = sphi 0, %s271
    %s288 = sphi 0, %s272
  $region4: #{similarity_tree_lstm_forward.1} parent=0 // loop_header_branch
    %20 = sbr.rel (%p18) target = $region8
  $region5: #{similarity_tree_lstm_forward.1} parent=0 // loop_body
    %s22 = ssub.s32 %s17, 1
    %s23 = ssub.s32 %s17, 2
    %s24 = sadd.s32 %s17, 1
    %s25 = ssub.s32 %s17, %s24
    %p26 = scmp.eq.s32.totalorder %s25, 0
    %s28 = sadd.s32 %s27, 1
    %s29 = scalar_select %p26, %s27, %s28
    %p32 = pneg %p26
    %p33 = scmp.eq.s32.totalorder %s17, 1
    %p34 = por %p32, %p33
    %p35 = scmp.ne.s32.totalorder %s27, %s30
    %p36 = scmp.eq.s32.totalorder %s17, 0
    %p37 = por %p35, %p36
    %p38 = scmp.ne.s32.totalorder %s27, %s30
    %p39 = scmp.eq.s32.totalorder %s22, 1
    %p40 = por %p38, %p39
    %p41 = scmp.ne.s32.totalorder %s30, %s31
    %p42 = scmp.eq.s32.totalorder %s22, 0
    %p43 = por %p41, %p42
    %p44 = scmp.ne.s32.totalorder %s30, %s31
    %p45 = scmp.eq.s32.totalorder %s23, 1
    %p46 = por %p44, %p45
    %p48 = scmp.ne.s32.totalorder %s31, %s47
    %p49 = scmp.eq.s32.totalorder %s23, 0
    %p50 = por %p48, %p49
    %s51 = ssub.s32 %s17, %s24
    %p52 = scmp.eq.s32.totalorder %s51, 0
    %s54 = sadd.s32 %s53, 1
    %s55 = scalar_select %p52, %s53, %s54
    %p58 = pneg %p52
    %p59 = scmp.eq.s32.totalorder %s17, 1
    %p60 = por %p58, %p59
    %p61 = scmp.ne.s32.totalorder %s53, %s56
    %p62 = scmp.eq.s32.totalorder %s17, 0
    %p63 = por %p61, %p62
    %p64 = scmp.ne.s32.totalorder %s53, %s56
    %p65 = scmp.eq.s32.totalorder %s22, 1
    %p66 = por %p64, %p65
    %p67 = scmp.ne.s32.totalorder %s56, %s57
    %p68 = scmp.eq.s32.totalorder %s22, 0
    %p69 = por %p67, %p68
    %p70 = scmp.ne.s32.totalorder %s56, %s57
    %p71 = scmp.eq.s32.totalorder %s23, 1
    %p72 = por %p70, %p71
    %p74 = scmp.ne.s32.totalorder %s57, %s73
    %p75 = scmp.eq.s32.totalorder %s23, 0
    %p76 = por %p74, %p75
    %s78 = sadd.s32 %s77, 1
    %p81 = scmp.eq.s32.totalorder %s17, 1
    %p82 = scmp.ne.s32.totalorder %s77, %s79
    %p83 = scmp.eq.s32.totalorder %s17, 0
    %p84 = por %p82, %p83
    %p85 = scmp.ne.s32.totalorder %s77, %s79
    %p86 = scmp.eq.s32.totalorder %s22, 1
    %p87 = por %p85, %p86
    %p88 = scmp.ne.s32.totalorder %s79, %s80
    %p89 = scmp.eq.s32.totalorder %s22, 0
    %p90 = por %p88, %p89
    %p91 = scmp.ne.s32.totalorder %s79, %s80
    %p92 = scmp.eq.s32.totalorder %s23, 1
    %p93 = por %p91, %p92
    %p95 = scmp.ne.s32.totalorder %s80, %s94
    %p96 = scmp.eq.s32.totalorder %s23, 0
    %p97 = por %p95, %p96
    %s99 = sadd.s32 %s98, 1
    %p102 = scmp.eq.s32.totalorder %s17, 1
    %p103 = scmp.ne.s32.totalorder %s98, %s100
    %p104 = scmp.eq.s32.totalorder %s17, 0
    %p105 = por %p103, %p104
    %p106 = scmp.ne.s32.totalorder %s98, %s100
    %p107 = scmp.eq.s32.totalorder %s22, 1
    %p108 = por %p106, %p107
    %p109 = scmp.ne.s32.totalorder %s100, %s101
    %p110 = scmp.eq.s32.totalorder %s22, 0
    %p111 = por %p109, %p110
    %p112 = scmp.ne.s32.totalorder %s100, %s101
    %p113 = scmp.eq.s32.totalorder %s23, 1
    %p114 = por %p112, %p113
    %p116 = scmp.ne.s32.totalorder %s101, %s115
    %p117 = scmp.eq.s32.totalorder %s23, 0
    %p118 = por %p116, %p117
    %s120 = sadd.s32 %s119, 1
    %p123 = scmp.eq.s32.totalorder %s17, 1
    %p124 = scmp.ne.s32.totalorder %s119, %s121
    %p125 = scmp.eq.s32.totalorder %s17, 0
    %p126 = por %p124, %p125
    %p127 = scmp.ne.s32.totalorder %s119, %s121
    %p128 = scmp.eq.s32.totalorder %s22, 1
    %p129 = por %p127, %p128
    %p130 = scmp.ne.s32.totalorder %s121, %s122
    %p131 = scmp.eq.s32.totalorder %s22, 0
    %p132 = por %p130, %p131
    %p133 = scmp.ne.s32.totalorder %s121, %s122
    %p134 = scmp.eq.s32.totalorder %s23, 1
    %p135 = por %p133, %p134
    %p137 = scmp.ne.s32.totalorder %s122, %s136
    %p138 = scmp.eq.s32.totalorder %s23, 0
    %p139 = por %p137, %p138
    %s141 = sadd.s32 %s140, 1
    %p144 = scmp.eq.s32.totalorder %s17, 1
    %p145 = scmp.ne.s32.totalorder %s140, %s142
    %p146 = scmp.eq.s32.totalorder %s17, 0
    %p147 = por %p145, %p146
    %p148 = scmp.ne.s32.totalorder %s140, %s142
    %p149 = scmp.eq.s32.totalorder %s22, 1
    %p150 = por %p148, %p149
    %p151 = scmp.ne.s32.totalorder %s142, %s143
    %p152 = scmp.eq.s32.totalorder %s22, 0
    %p153 = por %p151, %p152
    %p154 = scmp.ne.s32.totalorder %s142, %s143
    %p155 = scmp.eq.s32.totalorder %s23, 1
    %p156 = por %p154, %p155
    %p158 = scmp.ne.s32.totalorder %s143, %s157
    %p159 = scmp.eq.s32.totalorder %s23, 0
    %p160 = por %p158, %p159
    %s162 = sadd.s32 %s161, 1
    %p165 = scmp.eq.s32.totalorder %s17, 1
    %p166 = scmp.ne.s32.totalorder %s161, %s163
    %p167 = scmp.eq.s32.totalorder %s17, 0
    %p168 = por %p166, %p167
    %p169 = scmp.ne.s32.totalorder %s161, %s163
    %p170 = scmp.eq.s32.totalorder %s22, 1
    %p171 = por %p169, %p170
    %p172 = scmp.ne.s32.totalorder %s163, %s164
    %p173 = scmp.eq.s32.totalorder %s22, 0
    %p174 = por %p172, %p173
    %p175 = scmp.ne.s32.totalorder %s163, %s164
    %p176 = scmp.eq.s32.totalorder %s23, 1
    %p177 = por %p175, %p176
    %p179 = scmp.ne.s32.totalorder %s164, %s178
    %p180 = scmp.eq.s32.totalorder %s23, 0
    %p181 = por %p179, %p180
    %s183 = sadd.s32 %s182, 1
    %p186 = scmp.eq.s32.totalorder %s17, 1
    %p187 = scmp.ne.s32.totalorder %s182, %s184
    %p188 = scmp.eq.s32.totalorder %s17, 0
    %p189 = por %p187, %p188
    %p190 = scmp.ne.s32.totalorder %s182, %s184
    %p191 = scmp.eq.s32.totalorder %s22, 1
    %p192 = por %p190, %p191
    %p193 = scmp.ne.s32.totalorder %s184, %s185
    %p194 = scmp.eq.s32.totalorder %s22, 0
    %p195 = por %p193, %p194
    %p196 = scmp.ne.s32.totalorder %s184, %s185
    %p197 = scmp.eq.s32.totalorder %s23, 1
    %p198 = por %p196, %p197
    %p200 = scmp.ne.s32.totalorder %s185, %s199
    %p201 = scmp.eq.s32.totalorder %s23, 0
    %p202 = por %p200, %p201
    %s204 = sadd.s32 %s203, 1
    %p207 = scmp.eq.s32.totalorder %s17, 1
    %p208 = scmp.ne.s32.totalorder %s203, %s205
    %p209 = scmp.eq.s32.totalorder %s17, 0
    %p210 = por %p208, %p209
    %p211 = scmp.ne.s32.totalorder %s203, %s205
    %p212 = scmp.eq.s32.totalorder %s22, 1
    %p213 = por %p211, %p212
    %p214 = scmp.ne.s32.totalorder %s205, %s206
    %p215 = scmp.eq.s32.totalorder %s22, 0
    %p216 = por %p214, %p215
    %p217 = scmp.ne.s32.totalorder %s205, %s206
    %p218 = scmp.eq.s32.totalorder %s23, 1
    %p219 = por %p217, %p218
    %p221 = scmp.ne.s32.totalorder %s206, %s220
    %p222 = scmp.eq.s32.totalorder %s23, 0
    %p223 = por %p221, %p222
    %s225 = sadd.s32 %s224, 1
    %p228 = scmp.eq.s32.totalorder %s17, 1
    %p229 = scmp.ne.s32.totalorder %s224, %s226
    %p230 = scmp.eq.s32.totalorder %s17, 0
    %p231 = por %p229, %p230
    %p232 = scmp.ne.s32.totalorder %s224, %s226
    %p233 = scmp.eq.s32.totalorder %s22, 1
    %p234 = por %p232, %p233
    %p235 = scmp.ne.s32.totalorder %s226, %s227
    %p236 = scmp.eq.s32.totalorder %s22, 0
    %p237 = por %p235, %p236
    %p238 = scmp.ne.s32.totalorder %s226, %s227
    %p239 = scmp.eq.s32.totalorder %s23, 1
    %p240 = por %p238, %p239
    %p242 = scmp.ne.s32.totalorder %s227, %s241
    %p243 = scmp.eq.s32.totalorder %s23, 0
    %p244 = por %p242, %p243
    %s246 = sadd.s32 %s245, 1
    %p249 = scmp.eq.s32.totalorder %s17, 1
    %p250 = scmp.ne.s32.totalorder %s245, %s247
    %p251 = scmp.eq.s32.totalorder %s17, 0
    %p252 = por %p250, %p251
    %p253 = scmp.ne.s32.totalorder %s245, %s247
    %p254 = scmp.eq.s32.totalorder %s22, 1
    %p255 = por %p253, %p254
    %p256 = scmp.ne.s32.totalorder %s247, %s248
    %p257 = scmp.eq.s32.totalorder %s22, 0
    %p258 = por %p256, %p257
    %p259 = scmp.ne.s32.totalorder %s247, %s248
    %p260 = scmp.eq.s32.totalorder %s23, 1
    %p261 = por %p259, %p260
    %p263 = scmp.ne.s32.totalorder %s248, %s262
    %p264 = scmp.eq.s32.totalorder %s23, 0
    %p265 = por %p263, %p264
    %s266 = ssub.s32 %s17, %s24
    %p267 = scmp.eq.s32.totalorder %s266, 0
    %s269 = sadd.s32 %s268, 1
    %s270 = scalar_select %p267, %s268, %s269
    %p273 = pneg %p267
    %p274 = scmp.eq.s32.totalorder %s17, 1
    %p275 = por %p273, %p274
    %p276 = scmp.ne.s32.totalorder %s268, %s271
    %p277 = scmp.eq.s32.totalorder %s17, 0
    %p278 = por %p276, %p277
    %p279 = scmp.ne.s32.totalorder %s268, %s271
    %p280 = scmp.eq.s32.totalorder %s22, 1
    %p281 = por %p279, %p280
    %p282 = scmp.ne.s32.totalorder %s271, %s272
    %p283 = scmp.eq.s32.totalorder %s22, 0
    %p284 = por %p282, %p283
    %p285 = scmp.ne.s32.totalorder %s271, %s272
    %p286 = scmp.eq.s32.totalorder %s23, 1
    %p287 = por %p285, %p286
    %p289 = scmp.ne.s32.totalorder %s272, %s288
    %p290 = scmp.eq.s32.totalorder %s23, 0
    %p291 = por %p289, %p290
    %p292 = scmp.le.s32.totalorder 1, %s17
    %p293 = scmp.lt.s32.totalorder %s17, 3
    %p294 = pnand %p292, %p293
    %p295 = pneg %p294
    // Predicated region
    $region9: #{similarity_tree_lstm_forward.1} parent=5 // pred_check
      _
    $region10: #{similarity_tree_lstm_forward.1} parent=5 // pred_check_branch
      %297 = sbr.rel (%p294) target = $region12
    $region11: #{similarity_tree_lstm_forward.1} parent=5 // pred_region
      %s298 = ssub.s32 %s17, 1
      // Predicated region
      $region13: #{similarity_tree_lstm_forward.1} parent=11 // pred_check
        %p299 = pneg %p90
      $region14: #{similarity_tree_lstm_forward.1} parent=11 // pred_check_branch
        %301 = sbr.rel (%p299) target = $region16
      $region15: #{similarity_tree_lstm_forward.1} parent=11 // pred_region
        _
      $region16: #{similarity_tree_lstm_forward.1} parent=11 // pred_fallthru
        _
      // Predicated region
      $region17: #{similarity_tree_lstm_forward.1} parent=11 // pred_check
        %p302 = pneg %p111
      $region18: #{similarity_tree_lstm_forward.1} parent=11 // pred_check_branch
        %304 = sbr.rel (%p302) target = $region20
      $region19: #{similarity_tree_lstm_forward.1} parent=11 // pred_region
        _
      $region20: #{similarity_tree_lstm_forward.1} parent=11 // pred_fallthru
        _
      // Predicated region
      $region21: #{similarity_tree_lstm_forward.1} parent=11 // pred_check
        %p305 = pneg %p132
      $region22: #{similarity_tree_lstm_forward.1} parent=11 // pred_check_branch
        %307 = sbr.rel (%p305) target = $region24
      $region23: #{similarity_tree_lstm_forward.1} parent=11 // pred_region
        _
      $region24: #{similarity_tree_lstm_forward.1} parent=11 // pred_fallthru
        _
      // Predicated region
      $region25: #{similarity_tree_lstm_forward.1} parent=11 // pred_check
        %p308 = pneg %p153
      $region26: #{similarity_tree_lstm_forward.1} parent=11 // pred_check_branch
        %310 = sbr.rel (%p308) target = $region28
      $region27: #{similarity_tree_lstm_forward.1} parent=11 // pred_region
        _
      $region28: #{similarity_tree_lstm_forward.1} parent=11 // pred_fallthru
        _
      // Predicated region
      $region29: #{similarity_tree_lstm_forward.1} parent=11 // pred_check
        %p311 = pneg %p174
      $region30: #{similarity_tree_lstm_forward.1} parent=11 // pred_check_branch
        %313 = sbr.rel (%p311) target = $region32
      $region31: #{similarity_tree_lstm_forward.1} parent=11 // pred_region
        _
      $region32: #{similarity_tree_lstm_forward.1} parent=11 // pred_fallthru
        _
      // Predicated region
      $region33: #{similarity_tree_lstm_forward.1} parent=11 // pred_check
        %p314 = pneg %p195
      $region34: #{similarity_tree_lstm_forward.1} parent=11 // pred_check_branch
        %316 = sbr.rel (%p314) target = $region36
      $region35: #{similarity_tree_lstm_forward.1} parent=11 // pred_region
        _
      $region36: #{similarity_tree_lstm_forward.1} parent=11 // pred_fallthru
        _
      // Predicated region
      $region37: #{similarity_tree_lstm_forward.1} parent=11 // pred_check
        %p317 = pneg %p216
      $region38: #{similarity_tree_lstm_forward.1} parent=11 // pred_check_branch
        %319 = sbr.rel (%p317) target = $region40
      $region39: #{similarity_tree_lstm_forward.1} parent=11 // pred_region
        _
      $region40: #{similarity_tree_lstm_forward.1} parent=11 // pred_fallthru
        _
      // Predicated region
      $region41: #{similarity_tree_lstm_forward.1} parent=11 // pred_check
        %p320 = pneg %p237
      $region42: #{similarity_tree_lstm_forward.1} parent=11 // pred_check_branch
        %322 = sbr.rel (%p320) target = $region44
      $region43: #{similarity_tree_lstm_forward.1} parent=11 // pred_region
        _
      $region44: #{similarity_tree_lstm_forward.1} parent=11 // pred_fallthru
        _
      // Predicated region
      $region45: #{similarity_tree_lstm_forward.1} parent=11 // pred_check
        %p323 = pneg %p258
      $region46: #{similarity_tree_lstm_forward.1} parent=11 // pred_check_branch
        %325 = sbr.rel (%p323) target = $region48
      $region47: #{similarity_tree_lstm_forward.1} parent=11 // pred_region
        _
      $region48: #{similarity_tree_lstm_forward.1} parent=11 // pred_fallthru
        _
    $region12: #{similarity_tree_lstm_forward.1} parent=5 // pred_fallthru
      _
    %p326 = scmp.lt.s32.totalorder %s17, 2
    // Predicated region
    $region49: #{similarity_tree_lstm_forward.1} parent=5 // pred_check
      %p327 = pneg %p326
    $region50: #{similarity_tree_lstm_forward.1} parent=5 // pred_check_branch
      %329 = sbr.rel (%p327) target = $region52
    $region51: #{similarity_tree_lstm_forward.1} parent=5 // pred_region
      // Predicated region
      $region53: #{similarity_tree_lstm_forward.1} parent=51 // pred_check
        %p330 = pneg %p37
      $region54: #{similarity_tree_lstm_forward.1} parent=51 // pred_check_branch
        %332 = sbr.rel (%p330) target = $region56
      $region55: #{similarity_tree_lstm_forward.1} parent=51 // pred_region
        %s333 = smul.u32 16, %s17
        %p334 = scmp.lt.s32.totalorder %s333, 31
        %s335 = scalar_select %p334, %s333, 31
        %s336 = smul.addr %s335, 4
        %s337 = scalar_lea.vmem %s0, %s336
        %s338 = smul.u32 16, %s17
      $region56: #{similarity_tree_lstm_forward.1} parent=51 // pred_fallthru
        _
      // Predicated region
      $region57: #{similarity_tree_lstm_forward.1} parent=51 // pred_check
        %p339 = pneg %p63
      $region58: #{similarity_tree_lstm_forward.1} parent=51 // pred_check_branch
        %341 = sbr.rel (%p339) target = $region60
      $region59: #{similarity_tree_lstm_forward.1} parent=51 // pred_region
        %s342 = smul.u32 2, %s17
        %p343 = scmp.lt.s32.totalorder %s342, 3
        %s344 = scalar_select %p343, %s342, 3
        %s345 = smul.addr %s344, 8
        %s346 = scalar_lea.vmem %s1, %s345
        %s347 = smul.u32 2, %s17
      $region60: #{similarity_tree_lstm_forward.1} parent=51 // pred_fallthru
        _
    $region52: #{similarity_tree_lstm_forward.1} parent=5 // pred_fallthru
      _
    %p348 = scmp.le.s32.totalorder 1, %s17
    %p349 = scmp.lt.s32.totalorder %s17, 3
    %p350 = pnand %p348, %p349
    %p351 = pneg %p350
    // Predicated region
    $region61: #{similarity_tree_lstm_forward.1} parent=5 // pred_check
      _
    $region62: #{similarity_tree_lstm_forward.1} parent=5 // pred_check_branch
      %353 = sbr.rel (%p350) target = $region64
    $region63: #{similarity_tree_lstm_forward.1} parent=5 // pred_region
      %s354 = ssub.s32 %s17, 1
      %s355 = smul.u32 16, %s22
      %p356 = scmp.lt.s32.totalorder %s355, 31
      %s357 = scalar_select %p356, %s355, 31
      %s358 = smul.addr %s357, 4
      %s359 = scalar_lea.vmem %s0, %s358
      %p360 = pneg %p43
      %p361 = pneg %p40
      %s362 = smul.u32 2, %s22
      %p363 = scmp.lt.s32.totalorder %s362, 3
      %s364 = scalar_select %p363, %s362, 3
      %s365 = smul.addr %s364, 8
      %s366 = scalar_lea.vmem %s1, %s365
      %p367 = pneg %p69
      %p368 = pneg %p66
      %p369 = pneg %p90
      %p370 = pneg %p87
      %p371 = pneg %p111
      %p372 = pneg %p108
      %p373 = pneg %p132
      %p374 = pneg %p129
      %p375 = pneg %p153
      %p376 = pneg %p150
      %p377 = pneg %p174
      %p378 = pneg %p171
      %p379 = pneg %p195
      %p380 = pneg %p192
      %p381 = pneg %p216
      %p382 = pneg %p213
      %p383 = pneg %p237
      %p384 = pneg %p234
      %p385 = pneg %p258
      %p386 = pneg %p255
      %p387 = pneg %p284
      %p388 = pneg %p281
      %p389 = scmp.lt.s32.totalorder %s22, 1
      %s390 = scalar_select %p389, %s22, 1
      %s391 = smul.addr %s390, 8
      %s392 = scalar_lea.vmem %s11, %s391
      %s393 = smul.u32 16, %s22
      %p394 = scmp.lt.s32.totalorder %s393, 31
      %s395 = scalar_select %p394, %s393, 31
      %s396 = smul.addr %s395, 4
      %s397 = scalar_lea.vmem %s0, %s396
      %s398 = smul.u32 16, %s22
      %s399 = smul.u32 2, %s22
      %p400 = scmp.lt.s32.totalorder %s399, 3
      %s401 = scalar_select %p400, %s399, 3
      %s402 = smul.addr %s401, 8
      %s403 = scalar_lea.vmem %s1, %s402
      %s404 = smul.u32 2, %s22
      %p405 = scmp.lt.s32.totalorder %s22, 1
      %s406 = scalar_select %p405, %s22, 1
      %s407 = smul.addr %s406, 8
      %s408 = scalar_lea.vmem %s11, %s407
      %v410 = vld [vmem:[%s397] sm:$0xf]
      %v411 = vld [vmem:[%s397 + $0x4] sm:$0xf]
      %v412 = vld [vmem:[%s397 + $0x8] sm:$0xf]
      %v413 = vld [vmem:[%s397 + $0xc] sm:$0xf]
      %v414 = vld [vmem:[%s397 + $0x10] sm:$0xf]
      %v415 = vld [vmem:[%s397 + $0x14] sm:$0xf]
      %v416 = vld [vmem:[%s397 + $0x18] sm:$0xf]
      %v417 = vld [vmem:[%s397 + $0x1c] sm:$0xf]
      %v418 = vld [vmem:[%s397 + $0x20] sm:$0xf]
      %v419 = vld [vmem:[%s397 + $0x24] sm:$0xf]
      %v420 = vld [vmem:[%s397 + $0x28] sm:$0xf]
      %v421 = vld [vmem:[%s397 + $0x2c] sm:$0xf]
      %v422 = vld [vmem:[%s397 + $0x30] sm:$0xf]
      %v423 = vld [vmem:[%s397 + $0x34] sm:$0xf]
      %v424 = vld [vmem:[%s397 + $0x38] sm:$0xf]
      %v425 = vld [vmem:[%s397 + $0x3c] sm:$0xf]
      %v426 = vld [vmem:[%s2] sm:$0xff]
      %v427 = vld [vmem:[%s2 + $0x8] sm:$0xff]
      %v428 = vld [vmem:[%s2 + $0x10] sm:$0xff]
      %v429 = vld [vmem:[%s2 + $0x18] sm:$0xff]
      %v430 = vld [vmem:[%s2 + $0x20] sm:$0xff]
      %v431 = vld [vmem:[%s2 + $0x28] sm:$0xff]
      %v432 = vld [vmem:[%s2 + $0x30] sm:$0xff]
      %v433 = vld [vmem:[%s2 + $0x38] sm:$0xff]
      %v434 = vld [vmem:[%s2 + $0x40] sm:$0xff]
      %v435 = vld [vmem:[%s2 + $0x48] sm:$0xff]
      %v436 = vld [vmem:[%s2 + $0x50] sm:$0xff]
      %v437 = vld [vmem:[%s2 + $0x58] sm:$0xff]
      %v438 = vld [vmem:[%s2 + $0x60] sm:$0xff]
      %v439 = vld [vmem:[%s2 + $0x68] sm:$0xff]
      %v440 = vld [vmem:[%s2 + $0x70] sm:$0xff]
      %v441 = vld [vmem:[%s2 + $0x78] sm:$0xff]
      %v442 = vld [vmem:[%s3] sm:$0x3]
      %v444 = vperm.slane %v442, 0
      %v445 = vperm.slane %v442, 1
      %v464 = vunpack.c.l.b16 %v410
      %v465 = vunpack.c.l.b16 %v411
      %v466 = vunpack.c.l.b16 %v412
      %v467 = vunpack.c.l.b16 %v413
      %v468 = vunpack.c.l.b16 %v414
      %v469 = vunpack.c.l.b16 %v415
      %v470 = vunpack.c.l.b16 %v416
      %v471 = vunpack.c.l.b16 %v417
      %v472 = vunpack.c.l.b16 %v418
      %v473 = vunpack.c.l.b16 %v419
      %v474 = vunpack.c.l.b16 %v420
      %v475 = vunpack.c.l.b16 %v421
      %v476 = vunpack.c.l.b16 %v422
      %v477 = vunpack.c.l.b16 %v423
      %v478 = vunpack.c.l.b16 %v424
      %v479 = vunpack.c.l.b16 %v425
      %v480 = vpack.c.b16 %v465, %v464
      %v481 = vpack.c.b16 %v467, %v466
      %v482 = vpack.c.b16 %v469, %v468
      %v483 = vpack.c.b16 %v471, %v470
      %v484 = vpack.c.b16 %v473, %v472
      %v485 = vpack.c.b16 %v475, %v474
      %v486 = vpack.c.b16 %v477, %v476
      %v487 = vpack.c.b16 %v479, %v478
      %v512 = vunpack.c.l.b16 %v426
      %v513 = vunpack.c.h.b16 %v426
      %v514 = vunpack.c.l.b16 %v427
      %v515 = vunpack.c.h.b16 %v427
      %v516 = vunpack.c.l.b16 %v428
      %v517 = vunpack.c.h.b16 %v428
      %v518 = vunpack.c.l.b16 %v429
      %v519 = vunpack.c.h.b16 %v429
      %v520 = vunpack.c.l.b16 %v430
      %v521 = vunpack.c.h.b16 %v430
      %v522 = vunpack.c.l.b16 %v431
      %v523 = vunpack.c.h.b16 %v431
      %v524 = vunpack.c.l.b16 %v432
      %v525 = vunpack.c.h.b16 %v432
      %v526 = vunpack.c.l.b16 %v433
      %v527 = vunpack.c.h.b16 %v433
      %v528 = vunpack.c.l.b16 %v434
      %v529 = vunpack.c.h.b16 %v434
      %v530 = vunpack.c.l.b16 %v435
      %v531 = vunpack.c.h.b16 %v435
      %v532 = vunpack.c.l.b16 %v436
      %v533 = vunpack.c.h.b16 %v436
      %v534 = vunpack.c.l.b16 %v437
      %v535 = vunpack.c.h.b16 %v437
      %v536 = vunpack.c.l.b16 %v438
      %v537 = vunpack.c.h.b16 %v438
      %v538 = vunpack.c.l.b16 %v439
      %v539 = vunpack.c.h.b16 %v439
      %v540 = vunpack.c.l.b16 %v440
      %v541 = vunpack.c.h.b16 %v440
      %v542 = vunpack.c.l.b16 %v441
      %v543 = vunpack.c.h.b16 %v441
      %v544 = vpack.c.b16 %v514, %v512
      %v545 = vpack.c.b16 %v515, %v513
      %v546 = vpack.c.b16 %v518, %v516
      %v547 = vpack.c.b16 %v519, %v517
      %v548 = vpack.c.b16 %v522, %v520
      %v549 = vpack.c.b16 %v523, %v521
      %v550 = vpack.c.b16 %v526, %v524
      %v551 = vpack.c.b16 %v527, %v525
      %v552 = vpack.c.b16 %v530, %v528
      %v553 = vpack.c.b16 %v531, %v529
      %v554 = vpack.c.b16 %v534, %v532
      %v555 = vpack.c.b16 %v535, %v533
      %v556 = vpack.c.b16 %v538, %v536
      %v557 = vpack.c.b16 %v539, %v537
      %v558 = vpack.c.b16 %v542, %v540
      %v559 = vpack.c.b16 %v543, %v541
      %576 = vmatpush.bf16.msra.mxu0 %v558
      %577 = vmatpush.bf16.msra.mxu0 %v556
      %578 = vmatpush.bf16.msra.mxu0 %v554
      %579 = vmatpush.bf16.msra.mxu0 %v552
      %580 = vmatpush.bf16.msra.mxu0 %v550
      %581 = vmatpush.bf16.msra.mxu0 %v548
      %582 = vmatpush.bf16.msra.mxu0 %v546
      %583 = vmatpush.bf16.msra.mxu0 %v544
      %584 = vmatmul.bf16.gmra.mxu0 %v480
      %v585 = vpop.f32.mrf.mxu0
      %v586 = vadd.f32 %v444, %v585
      %v587 = vpop.f32.mrf.mxu0
      %v588 = vadd.f32 %v444, %v587
      %589 = vmatmul.bf16.gmra.mxu0 %v481
      %v590 = vpop.f32.mrf.mxu0
      %v591 = vadd.f32 %v444, %v590
      %v592 = vpop.f32.mrf.mxu0
      %v593 = vadd.f32 %v444, %v592
      %594 = vmatmul.bf16.gmra.mxu0 %v482
      %v595 = vpop.f32.mrf.mxu0
      %v596 = vadd.f32 %v444, %v595
      %v597 = vpop.f32.mrf.mxu0
      %v598 = vadd.f32 %v444, %v597
      %599 = vmatmul.bf16.gmra.mxu0 %v483
      %v600 = vpop.f32.mrf.mxu0
      %v601 = vadd.f32 %v444, %v600
      %v602 = vpop.f32.mrf.mxu0
      %v603 = vadd.f32 %v444, %v602
      %604 = vmatmul.bf16.gmra.mxu0 %v484
      %v605 = vpop.f32.mrf.mxu0
      %v606 = vadd.f32 %v444, %v605
      %v607 = vpop.f32.mrf.mxu0
      %v608 = vadd.f32 %v444, %v607
      %609 = vmatmul.bf16.gmra.mxu0 %v485
      %v610 = vpop.f32.mrf.mxu0
      %v611 = vadd.f32 %v444, %v610
      %v612 = vpop.f32.mrf.mxu0
      %v613 = vadd.f32 %v444, %v612
      %614 = vmatmul.bf16.gmra.mxu0 %v486
      %v615 = vpop.f32.mrf.mxu0
      %v616 = vadd.f32 %v444, %v615
      %v617 = vpop.f32.mrf.mxu0
      %v618 = vadd.f32 %v444, %v617
      %619 = vmatmul.bf16.gmra.mxu0 %v487
      %v620 = vpop.f32.mrf.mxu0
      %v621 = vadd.f32 %v444, %v620
      %v622 = vpop.f32.mrf.mxu0
      %v623 = vadd.f32 %v444, %v622
      %624 = vdwg.mxu0
      %625 = vmatpush.bf16.msra.mxu0 %v559
      %626 = vmatpush.bf16.msra.mxu0 %v557
      %627 = vmatpush.bf16.msra.mxu0 %v555
      %628 = vmatpush.bf16.msra.mxu0 %v553
      %629 = vmatpush.bf16.msra.mxu0 %v551
      %630 = vmatpush.bf16.msra.mxu0 %v549
      %631 = vmatpush.bf16.msra.mxu0 %v547
      %632 = vmatpush.bf16.msra.mxu0 %v545
      %633 = vmatmul.bf16.gmra.mxu0 %v480
      %v634 = vpop.f32.mrf.mxu0
      %v635 = vadd.f32 %v445, %v634
      %v636 = vpop.f32.mrf.mxu0
      %v637 = vadd.f32 %v445, %v636
      %638 = vmatmul.bf16.gmra.mxu0 %v481
      %v639 = vpop.f32.mrf.mxu0
      %v640 = vadd.f32 %v445, %v639
      %v641 = vpop.f32.mrf.mxu0
      %v642 = vadd.f32 %v445, %v641
      %643 = vmatmul.bf16.gmra.mxu0 %v482
      %v644 = vpop.f32.mrf.mxu0
      %v645 = vadd.f32 %v445, %v644
      %v646 = vpop.f32.mrf.mxu0
      %v647 = vadd.f32 %v445, %v646
      %648 = vmatmul.bf16.gmra.mxu0 %v483
      %v649 = vpop.f32.mrf.mxu0
      %v650 = vadd.f32 %v445, %v649
      %v651 = vpop.f32.mrf.mxu0
      %v652 = vadd.f32 %v445, %v651
      %653 = vmatmul.bf16.gmra.mxu0 %v484
      %v654 = vpop.f32.mrf.mxu0
      %v655 = vadd.f32 %v445, %v654
      %v656 = vpop.f32.mrf.mxu0
      %v657 = vadd.f32 %v445, %v656
      %658 = vmatmul.bf16.gmra.mxu0 %v485
      %v659 = vpop.f32.mrf.mxu0
      %v660 = vadd.f32 %v445, %v659
      %v661 = vpop.f32.mrf.mxu0
      %v662 = vadd.f32 %v445, %v661
      %663 = vmatmul.bf16.gmra.mxu0 %v486
      %v664 = vpop.f32.mrf.mxu0
      %v665 = vadd.f32 %v445, %v664
      %v666 = vpop.f32.mrf.mxu0
      %v667 = vadd.f32 %v445, %v666
      %668 = vmatmul.bf16.gmra.mxu0 %v487
      %v669 = vpop.f32.mrf.mxu0
      %v670 = vadd.f32 %v445, %v669
      %v671 = vpop.f32.mrf.mxu0
      %v672 = vadd.f32 %v445, %v671
      %673 = vdwg.mxu0
      %v674 = vld [vmem:[%s403] sm:$0xff]
      %v675 = vld [vmem:[%s403 + $0x8] sm:$0xff]
      %v676 = vld [vmem:[%s4] sm:$0xff]
      %v677 = vld [vmem:[%s4 + $0x8] sm:$0xff]
      %v678 = vld [vmem:[%s4 + $0x10] sm:$0xff]
      %v679 = vld [vmem:[%s4 + $0x18] sm:$0xff]
      %v680 = vld [vmem:[%s4 + $0x20] sm:$0xff]
      %v681 = vld [vmem:[%s4 + $0x28] sm:$0xff]
      %v682 = vld [vmem:[%s4 + $0x30] sm:$0xff]
      %v683 = vld [vmem:[%s4 + $0x38] sm:$0xff]
      %v692 = vunpack.c.l.b16 %v676
      %v693 = vunpack.c.h.b16 %v676
      %v694 = vunpack.c.l.b16 %v677
      %v695 = vunpack.c.h.b16 %v677
      %v696 = vunpack.c.l.b16 %v678
      %v697 = vunpack.c.h.b16 %v678
      %v698 = vunpack.c.l.b16 %v679
      %v699 = vunpack.c.h.b16 %v679
      %v700 = vunpack.c.l.b16 %v680
      %v701 = vunpack.c.h.b16 %v680
      %v702 = vunpack.c.l.b16 %v681
      %v703 = vunpack.c.h.b16 %v681
      %v704 = vunpack.c.l.b16 %v682
      %v705 = vunpack.c.h.b16 %v682
      %v706 = vunpack.c.l.b16 %v683
      %v707 = vunpack.c.h.b16 %v683
      %v708 = vpack.c.b16 %v694, %v692
      %v709 = vpack.c.b16 %v695, %v693
      %v710 = vpack.c.b16 %v698, %v696
      %v711 = vpack.c.b16 %v699, %v697
      %v712 = vpack.c.b16 %v702, %v700
      %v713 = vpack.c.b16 %v703, %v701
      %v714 = vpack.c.b16 %v706, %v704
      %v715 = vpack.c.b16 %v707, %v705
      %vm724 = vcmask 523264
      %v726 = vsel %vm724, 0, 0
      %728 = vmatpush.bf16.msra.mxu0 0
      %729 = vmatpush.bf16.msra.mxu0 0
      %730 = vmatpush.bf16.msra.mxu0 0
      %731 = vmatpush.bf16.msra.mxu0 0
      %732 = vmatpush.bf16.msra.mxu0 %v714
      %733 = vmatpush.bf16.msra.mxu0 %v712
      %734 = vmatpush.bf16.msra.mxu0 %v710
      %735 = vmatpush.bf16.msra.mxu0 %v708
      %736 = vmatmul.bf16.gmra.mxu0 %v726
      %v737 = vpop.f32.mrf.mxu0
      %v738 = vadd.f32 0.0, %v737
      %v739 = vpop.f32.mrf.mxu0
      %v740 = vadd.f32 0.0, %v739
      %741 = vdwg.mxu0
      %742 = vmatpush.bf16.msra.mxu0 0
      %743 = vmatpush.bf16.msra.mxu0 0
      %744 = vmatpush.bf16.msra.mxu0 0
      %745 = vmatpush.bf16.msra.mxu0 0
      %746 = vmatpush.bf16.msra.mxu0 %v715
      %747 = vmatpush.bf16.msra.mxu0 %v713
      %748 = vmatpush.bf16.msra.mxu0 %v711
      %749 = vmatpush.bf16.msra.mxu0 %v709
      %750 = vmatmul.bf16.gmra.mxu0 %v726
      %v751 = vpop.f32.mrf.mxu0
      %v752 = vadd.f32 0.0, %v751
      %v753 = vpop.f32.mrf.mxu0
      %v754 = vadd.f32 0.0, %v753
      %755 = vdwg.mxu0
      %v756 = vadd.f32 %v586, %v738
      %v757 = vadd.f32 %v635, %v752
      %v758 = vadd.f32 %v588, %v740
      %v759 = vadd.f32 %v637, %v754
      %v760 = vmul.f32 %v756, 0.5
      %v761 = vmul.f32 %v757, 0.5
      %v762 = vmul.f32 %v758, 0.5
      %v763 = vmul.f32 %v759, 0.5
      %v764 = vtanh.pop %v760
      %v765 = vtanh.pop %v761
      %v766 = vtanh.pop %v762
      %v767 = vtanh.pop %v763
      %v768 = vadd.f32 %v764, 1.0
      %v769 = vadd.f32 %v766, 1.0
      %v770 = vmul.f32 %v768, 0.5
      %v771 = vmul.f32 %v769, 0.5
      %v772 = vadd.f32 %v765, 1.0
      %v773 = vadd.f32 %v767, 1.0
      %v774 = vmul.f32 %v772, 0.5
      %v775 = vmul.f32 %v773, 0.5
      %v776 = vmul.f32 %v770, 0.0
      %v777 = vmul.f32 %v771, 0.0
      %v778 = vmul.f32 %v770, %v765
      %v779 = vmul.f32 %v771, %v767
      %782 = vrot.lane.b32.xlu0 %v778, 64
      %v783 = vpop.permute.xlu0 %782
      %784 = vrot.lane.b32.xlu0 %v779, 64
      %v785 = vpop.permute.xlu0 %784
      %v788 = vadd.f32 %v776, %v783
      %v789 = vadd.f32 %v777, %v785
      %v790 = vtanh.pop %v788
      %v791 = vtanh.pop %v789
      %v792 = vmul.f32 %v774, %v790
      %v793 = vmul.f32 %v775, %v791
      %vm794 = vcmp.gt.s32.totalorder %v674, 0
      %vm795 = vcmp.gt.s32.totalorder %v675, 0
      %v796 = vsel %vm794, 1, 0
      %v797 = vsel %vm795, 1, 0
      %798 = vset.pattern.permute.xlu0 0
      %799 = vperm.xlu0 %798, %v796
      %v800 = vpop.permute.xlu0 %799
      %801 = vset.pattern.permute.xlu0 0
      %802 = vperm.xlu0 %801, %v797
      %v803 = vpop.permute.xlu0 %802
      %vm804 = vcmp.eq.s32.totalorder %v800, 1
      %vm805 = vcmp.eq.s32.totalorder %v803, 1
      %v806 = vsel %vm804, %v788, 0.0
      %v807 = vsel %vm805, %v789, 0.0
      %v808 = vsel %vm804, %v792, 0.0
      %v809 = vsel %vm805, %v793, 0.0
      %v810 = vpack.c.bf16 %v809, %v808
      %812 = vrot.lane.b32.xlu0 %v810, 64
      %v813 = vpop.permute.xlu0 %812
      %v815 = vsel %vm724, %v813, 0
      %817 = vmatpush.bf16.msra.mxu0 0
      %818 = vmatpush.bf16.msra.mxu0 0
      %819 = vmatpush.bf16.msra.mxu0 0
      %820 = vmatpush.bf16.msra.mxu0 0
      %821 = vmatpush.bf16.msra.mxu0 %v714
      %822 = vmatpush.bf16.msra.mxu0 %v712
      %823 = vmatpush.bf16.msra.mxu0 %v710
      %824 = vmatpush.bf16.msra.mxu0 %v708
      %825 = vmatmul.bf16.gmra.mxu0 %v815
      %v826 = vpop.f32.mrf.mxu0
      %v827 = vadd.f32 0.0, %v826
      %v828 = vpop.f32.mrf.mxu0
      %v829 = vadd.f32 0.0, %v828
      %830 = vdwg.mxu0
      %831 = vmatpush.bf16.msra.mxu0 0
      %832 = vmatpush.bf16.msra.mxu0 0
      %833 = vmatpush.bf16.msra.mxu0 0
      %834 = vmatpush.bf16.msra.mxu0 0
      %835 = vmatpush.bf16.msra.mxu0 %v715
      %836 = vmatpush.bf16.msra.mxu0 %v713
      %837 = vmatpush.bf16.msra.mxu0 %v711
      %838 = vmatpush.bf16.msra.mxu0 %v709
      %839 = vmatmul.bf16.gmra.mxu0 %v815
      %v840 = vpop.f32.mrf.mxu0
      %v841 = vadd.f32 0.0, %v840
      %v842 = vpop.f32.mrf.mxu0
      %v843 = vadd.f32 0.0, %v842
      %844 = vdwg.mxu0
      %v845 = vadd.f32 %v591, %v827
      %v846 = vadd.f32 %v640, %v841
      %v847 = vadd.f32 %v593, %v829
      %v848 = vadd.f32 %v642, %v843
      %v849 = vmul.f32 %v845, 0.5
      %v850 = vmul.f32 %v846, 0.5
      %v851 = vmul.f32 %v847, 0.5
      %v852 = vmul.f32 %v848, 0.5
      %v853 = vtanh.pop %v849
      %v854 = vtanh.pop %v850
      %v855 = vtanh.pop %v851
      %v856 = vtanh.pop %v852
      %v857 = vadd.f32 %v853, 1.0
      %v858 = vadd.f32 %v855, 1.0
      %v859 = vmul.f32 %v857, 0.5
      %v860 = vmul.f32 %v858, 0.5
      %v861 = vadd.f32 %v854, 1.0
      %v862 = vadd.f32 %v856, 1.0
      %v863 = vmul.f32 %v861, 0.5
      %v864 = vmul.f32 %v862, 0.5
      %v865 = vmul.f32 %v859, %v806
      %v866 = vmul.f32 %v860, %v807
      %v867 = vmul.f32 %v859, %v854
      %v868 = vmul.f32 %v860, %v856
      %871 = vrot.lane.b32.xlu0 %v867, 64
      %v872 = vpop.permute.xlu0 %871
      %873 = vrot.lane.b32.xlu0 %v868, 64
      %v874 = vpop.permute.xlu0 %873
      %v877 = vadd.f32 %v865, %v872
      %v878 = vadd.f32 %v866, %v874
      %v879 = vtanh.pop %v877
      %v880 = vtanh.pop %v878
      %v881 = vmul.f32 %v863, %v879
      %v882 = vmul.f32 %v864, %v880
      %vm883 = vcmp.gt.s32.totalorder %v674, 1
      %vm884 = vcmp.gt.s32.totalorder %v675, 1
      %v885 = vsel %vm883, 1, 0
      %v886 = vsel %vm884, 1, 0
      %887 = vset.pattern.permute.xlu0 0
      %888 = vperm.xlu0 %887, %v885
      %v889 = vpop.permute.xlu0 %888
      %890 = vset.pattern.permute.xlu0 0
      %891 = vperm.xlu0 %890, %v886
      %v892 = vpop.permute.xlu0 %891
      %vm893 = vcmp.eq.s32.totalorder %v889, 1
      %vm894 = vcmp.eq.s32.totalorder %v892, 1
      %v895 = vsel %vm893, %v877, %v806
      %v896 = vsel %vm894, %v878, %v807
      %v897 = vsel %vm893, %v881, %v808
      %v898 = vsel %vm894, %v882, %v809
      %v899 = vpack.c.bf16 %v898, %v897
      %901 = vrot.lane.b32.xlu0 %v899, 64
      %v902 = vpop.permute.xlu0 %901
      %v904 = vsel %vm724, %v902, 0
      %906 = vmatpush.bf16.msra.mxu0 0
      %907 = vmatpush.bf16.msra.mxu0 0
      %908 = vmatpush.bf16.msra.mxu0 0
      %909 = vmatpush.bf16.msra.mxu0 0
      %910 = vmatpush.bf16.msra.mxu0 %v714
      %911 = vmatpush.bf16.msra.mxu0 %v712
      %912 = vmatpush.bf16.msra.mxu0 %v710
      %913 = vmatpush.bf16.msra.mxu0 %v708
      %914 = vmatmul.bf16.gmra.mxu0 %v904
      %v915 = vpop.f32.mrf.mxu0
      %v916 = vadd.f32 0.0, %v915
      %v917 = vpop.f32.mrf.mxu0
      %v918 = vadd.f32 0.0, %v917
      %919 = vdwg.mxu0
      %920 = vmatpush.bf16.msra.mxu0 0
      %921 = vmatpush.bf16.msra.mxu0 0
      %922 = vmatpush.bf16.msra.mxu0 0
      %923 = vmatpush.bf16.msra.mxu0 0
      %924 = vmatpush.bf16.msra.mxu0 %v715
      %925 = vmatpush.bf16.msra.mxu0 %v713
      %926 = vmatpush.bf16.msra.mxu0 %v711
      %927 = vmatpush.bf16.msra.mxu0 %v709
      %928 = vmatmul.bf16.gmra.mxu0 %v904
      %v929 = vpop.f32.mrf.mxu0
      %v930 = vadd.f32 0.0, %v929
      %v931 = vpop.f32.mrf.mxu0
      %v932 = vadd.f32 0.0, %v931
      %933 = vdwg.mxu0
      %v934 = vadd.f32 %v596, %v916
      %v935 = vadd.f32 %v645, %v930
      %v936 = vadd.f32 %v598, %v918
      %v937 = vadd.f32 %v647, %v932
      %v938 = vmul.f32 %v934, 0.5
      %v939 = vmul.f32 %v935, 0.5
      %v940 = vmul.f32 %v936, 0.5
      %v941 = vmul.f32 %v937, 0.5
      %v942 = vtanh.pop %v938
      %v943 = vtanh.pop %v939
      %v944 = vtanh.pop %v940
      %v945 = vtanh.pop %v941
      %v946 = vadd.f32 %v942, 1.0
      %v947 = vadd.f32 %v944, 1.0
      %v948 = vmul.f32 %v946, 0.5
      %v949 = vmul.f32 %v947, 0.5
      %v950 = vadd.f32 %v943, 1.0
      %v951 = vadd.f32 %v945, 1.0
      %v952 = vmul.f32 %v950, 0.5
      %v953 = vmul.f32 %v951, 0.5
      %v954 = vmul.f32 %v948, %v895
      %v955 = vmul.f32 %v949, %v896
      %v956 = vmul.f32 %v948, %v943
      %v957 = vmul.f32 %v949, %v945
      %960 = vrot.lane.b32.xlu0 %v956, 64
      %v961 = vpop.permute.xlu0 %960
      %962 = vrot.lane.b32.xlu0 %v957, 64
      %v963 = vpop.permute.xlu0 %962
      %v966 = vadd.f32 %v954, %v961
      %v967 = vadd.f32 %v955, %v963
      %v968 = vtanh.pop %v966
      %v969 = vtanh.pop %v967
      %v970 = vmul.f32 %v952, %v968
      %v971 = vmul.f32 %v953, %v969
      %vm972 = vcmp.gt.s32.totalorder %v674, 2
      %vm973 = vcmp.gt.s32.totalorder %v675, 2
      %v974 = vsel %vm972, 1, 0
      %v975 = vsel %vm973, 1, 0
      %976 = vset.pattern.permute.xlu0 0
      %977 = vperm.xlu0 %976, %v974
      %v978 = vpop.permute.xlu0 %977
      %979 = vset.pattern.permute.xlu0 0
      %980 = vperm.xlu0 %979, %v975
      %v981 = vpop.permute.xlu0 %980
      %vm982 = vcmp.eq.s32.totalorder %v978, 1
      %vm983 = vcmp.eq.s32.totalorder %v981, 1
      %v984 = vsel %vm982, %v966, %v895
      %v985 = vsel %vm983, %v967, %v896
      %v986 = vsel %vm982, %v970, %v897
      %v987 = vsel %vm983, %v971, %v898
      %v988 = vpack.c.bf16 %v987, %v986
      %990 = vrot.lane.b32.xlu0 %v988, 64
      %v991 = vpop.permute.xlu0 %990
      %v993 = vsel %vm724, %v991, 0
      %995 = vmatpush.bf16.msra.mxu0 0
      %996 = vmatpush.bf16.msra.mxu0 0
      %997 = vmatpush.bf16.msra.mxu0 0
      %998 = vmatpush.bf16.msra.mxu0 0
      %999 = vmatpush.bf16.msra.mxu0 %v714
      %1000 = vmatpush.bf16.msra.mxu0 %v712
      %1001 = vmatpush.bf16.msra.mxu0 %v710
      %1002 = vmatpush.bf16.msra.mxu0 %v708
      %1003 = vmatmul.bf16.gmra.mxu0 %v993
      %v1004 = vpop.f32.mrf.mxu0
      %v1005 = vadd.f32 0.0, %v1004
      %v1006 = vpop.f32.mrf.mxu0
      %v1007 = vadd.f32 0.0, %v1006
      %1008 = vdwg.mxu0
      %1009 = vmatpush.bf16.msra.mxu0 0
      %1010 = vmatpush.bf16.msra.mxu0 0
      %1011 = vmatpush.bf16.msra.mxu0 0
      %1012 = vmatpush.bf16.msra.mxu0 0
      %1013 = vmatpush.bf16.msra.mxu0 %v715
      %1014 = vmatpush.bf16.msra.mxu0 %v713
      %1015 = vmatpush.bf16.msra.mxu0 %v711
      %1016 = vmatpush.bf16.msra.mxu0 %v709
      %1017 = vmatmul.bf16.gmra.mxu0 %v993
      %v1018 = vpop.f32.mrf.mxu0
      %v1019 = vadd.f32 0.0, %v1018
      %v1020 = vpop.f32.mrf.mxu0
      %v1021 = vadd.f32 0.0, %v1020
      %1022 = vdwg.mxu0
      %v1023 = vadd.f32 %v601, %v1005
      %v1024 = vadd.f32 %v650, %v1019
      %v1025 = vadd.f32 %v603, %v1007
      %v1026 = vadd.f32 %v652, %v1021
      %v1027 = vmul.f32 %v1023, 0.5
      %v1028 = vmul.f32 %v1024, 0.5
      %v1029 = vmul.f32 %v1025, 0.5
      %v1030 = vmul.f32 %v1026, 0.5
      %v1031 = vtanh.pop %v1027
      %v1032 = vtanh.pop %v1028
      %v1033 = vtanh.pop %v1029
      %v1034 = vtanh.pop %v1030
      %v1035 = vadd.f32 %v1031, 1.0
      %v1036 = vadd.f32 %v1033, 1.0
      %v1037 = vmul.f32 %v1035, 0.5
      %v1038 = vmul.f32 %v1036, 0.5
      %v1039 = vadd.f32 %v1032, 1.0
      %v1040 = vadd.f32 %v1034, 1.0
      %v1041 = vmul.f32 %v1039, 0.5
      %v1042 = vmul.f32 %v1040, 0.5
      %v1043 = vmul.f32 %v1037, %v984
      %v1044 = vmul.f32 %v1038, %v985
      %v1045 = vmul.f32 %v1037, %v1032
      %v1046 = vmul.f32 %v1038, %v1034
      %1049 = vrot.lane.b32.xlu0 %v1045, 64
      %v1050 = vpop.permute.xlu0 %1049
      %1051 = vrot.lane.b32.xlu0 %v1046, 64
      %v1052 = vpop.permute.xlu0 %1051
      %v1055 = vadd.f32 %v1043, %v1050
      %v1056 = vadd.f32 %v1044, %v1052
      %v1057 = vtanh.pop %v1055
      %v1058 = vtanh.pop %v1056
      %v1059 = vmul.f32 %v1041, %v1057
      %v1060 = vmul.f32 %v1042, %v1058
      %vm1061 = vcmp.gt.s32.totalorder %v674, 3
      %vm1062 = vcmp.gt.s32.totalorder %v675, 3
      %v1063 = vsel %vm1061, 1, 0
      %v1064 = vsel %vm1062, 1, 0
      %1065 = vset.pattern.permute.xlu0 0
      %1066 = vperm.xlu0 %1065, %v1063
      %v1067 = vpop.permute.xlu0 %1066
      %1068 = vset.pattern.permute.xlu0 0
      %1069 = vperm.xlu0 %1068, %v1064
      %v1070 = vpop.permute.xlu0 %1069
      %vm1071 = vcmp.eq.s32.totalorder %v1067, 1
      %vm1072 = vcmp.eq.s32.totalorder %v1070, 1
      %v1073 = vsel %vm1071, %v1055, %v984
      %v1074 = vsel %vm1072, %v1056, %v985
      %v1075 = vsel %vm1071, %v1059, %v986
      %v1076 = vsel %vm1072, %v1060, %v987
      %v1077 = vpack.c.bf16 %v1076, %v1075
      %1079 = vrot.lane.b32.xlu0 %v1077, 64
      %v1080 = vpop.permute.xlu0 %1079
      %v1082 = vsel %vm724, %v1080, 0
      %1084 = vmatpush.bf16.msra.mxu0 0
      %1085 = vmatpush.bf16.msra.mxu0 0
      %1086 = vmatpush.bf16.msra.mxu0 0
      %1087 = vmatpush.bf16.msra.mxu0 0
      %1088 = vmatpush.bf16.msra.mxu0 %v714
      %1089 = vmatpush.bf16.msra.mxu0 %v712
      %1090 = vmatpush.bf16.msra.mxu0 %v710
      %1091 = vmatpush.bf16.msra.mxu0 %v708
      %1092 = vmatmul.bf16.gmra.mxu0 %v1082
      %v1093 = vpop.f32.mrf.mxu0
      %v1094 = vadd.f32 0.0, %v1093
      %v1095 = vpop.f32.mrf.mxu0
      %v1096 = vadd.f32 0.0, %v1095
      %1097 = vdwg.mxu0
      %1098 = vmatpush.bf16.msra.mxu0 0
      %1099 = vmatpush.bf16.msra.mxu0 0
      %1100 = vmatpush.bf16.msra.mxu0 0
      %1101 = vmatpush.bf16.msra.mxu0 0
      %1102 = vmatpush.bf16.msra.mxu0 %v715
      %1103 = vmatpush.bf16.msra.mxu0 %v713
      %1104 = vmatpush.bf16.msra.mxu0 %v711
      %1105 = vmatpush.bf16.msra.mxu0 %v709
      %1106 = vmatmul.bf16.gmra.mxu0 %v1082
      %v1107 = vpop.f32.mrf.mxu0
      %v1108 = vadd.f32 0.0, %v1107
      %v1109 = vpop.f32.mrf.mxu0
      %v1110 = vadd.f32 0.0, %v1109
      %1111 = vdwg.mxu0
      %v1112 = vadd.f32 %v606, %v1094
      %v1113 = vadd.f32 %v655, %v1108
      %v1114 = vadd.f32 %v608, %v1096
      %v1115 = vadd.f32 %v657, %v1110
      %v1116 = vmul.f32 %v1112, 0.5
      %v1117 = vmul.f32 %v1113, 0.5
      %v1118 = vmul.f32 %v1114, 0.5
      %v1119 = vmul.f32 %v1115, 0.5
      %v1120 = vtanh.pop %v1116
      %v1121 = vtanh.pop %v1117
      %v1122 = vtanh.pop %v1118
      %v1123 = vtanh.pop %v1119
      %v1124 = vadd.f32 %v1120, 1.0
      %v1125 = vadd.f32 %v1122, 1.0
      %v1126 = vmul.f32 %v1124, 0.5
      %v1127 = vmul.f32 %v1125, 0.5
      %v1128 = vadd.f32 %v1121, 1.0
      %v1129 = vadd.f32 %v1123, 1.0
      %v1130 = vmul.f32 %v1128, 0.5
      %v1131 = vmul.f32 %v1129, 0.5
      %v1132 = vmul.f32 %v1126, %v1073
      %v1133 = vmul.f32 %v1127, %v1074
      %v1134 = vmul.f32 %v1126, %v1121
      %v1135 = vmul.f32 %v1127, %v1123
      %1138 = vrot.lane.b32.xlu0 %v1134, 64
      %v1139 = vpop.permute.xlu0 %1138
      %1140 = vrot.lane.b32.xlu0 %v1135, 64
      %v1141 = vpop.permute.xlu0 %1140
      %v1144 = vadd.f32 %v1132, %v1139
      %v1145 = vadd.f32 %v1133, %v1141
      %v1146 = vtanh.pop %v1144
      %v1147 = vtanh.pop %v1145
      %v1148 = vmul.f32 %v1130, %v1146
      %v1149 = vmul.f32 %v1131, %v1147
      %vm1150 = vcmp.gt.s32.totalorder %v674, 4
      %vm1151 = vcmp.gt.s32.totalorder %v675, 4
      %v1152 = vsel %vm1150, 1, 0
      %v1153 = vsel %vm1151, 1, 0
      %1154 = vset.pattern.permute.xlu0 0
      %1155 = vperm.xlu0 %1154, %v1152
      %v1156 = vpop.permute.xlu0 %1155
      %1157 = vset.pattern.permute.xlu0 0
      %1158 = vperm.xlu0 %1157, %v1153
      %v1159 = vpop.permute.xlu0 %1158
      %vm1160 = vcmp.eq.s32.totalorder %v1156, 1
      %vm1161 = vcmp.eq.s32.totalorder %v1159, 1
      %v1162 = vsel %vm1160, %v1144, %v1073
      %v1163 = vsel %vm1161, %v1145, %v1074
      %v1164 = vsel %vm1160, %v1148, %v1075
      %v1165 = vsel %vm1161, %v1149, %v1076
      %v1166 = vpack.c.bf16 %v1165, %v1164
      %1168 = vrot.lane.b32.xlu0 %v1166, 64
      %v1169 = vpop.permute.xlu0 %1168
      %v1171 = vsel %vm724, %v1169, 0
      %1173 = vmatpush.bf16.msra.mxu0 0
      %1174 = vmatpush.bf16.msra.mxu0 0
      %1175 = vmatpush.bf16.msra.mxu0 0
      %1176 = vmatpush.bf16.msra.mxu0 0
      %1177 = vmatpush.bf16.msra.mxu0 %v714
      %1178 = vmatpush.bf16.msra.mxu0 %v712
      %1179 = vmatpush.bf16.msra.mxu0 %v710
      %1180 = vmatpush.bf16.msra.mxu0 %v708
      %1181 = vmatmul.bf16.gmra.mxu0 %v1171
      %v1182 = vpop.f32.mrf.mxu0
      %v1183 = vadd.f32 0.0, %v1182
      %v1184 = vpop.f32.mrf.mxu0
      %v1185 = vadd.f32 0.0, %v1184
      %1186 = vdwg.mxu0
      %1187 = vmatpush.bf16.msra.mxu0 0
      %1188 = vmatpush.bf16.msra.mxu0 0
      %1189 = vmatpush.bf16.msra.mxu0 0
      %1190 = vmatpush.bf16.msra.mxu0 0
      %1191 = vmatpush.bf16.msra.mxu0 %v715
      %1192 = vmatpush.bf16.msra.mxu0 %v713
      %1193 = vmatpush.bf16.msra.mxu0 %v711
      %1194 = vmatpush.bf16.msra.mxu0 %v709
      %1195 = vmatmul.bf16.gmra.mxu0 %v1171
      %v1196 = vpop.f32.mrf.mxu0
      %v1197 = vadd.f32 0.0, %v1196
      %v1198 = vpop.f32.mrf.mxu0
      %v1199 = vadd.f32 0.0, %v1198
      %1200 = vdwg.mxu0
      %v1201 = vadd.f32 %v611, %v1183
      %v1202 = vadd.f32 %v660, %v1197
      %v1203 = vadd.f32 %v613, %v1185
      %v1204 = vadd.f32 %v662, %v1199
      %v1205 = vmul.f32 %v1201, 0.5
      %v1206 = vmul.f32 %v1202, 0.5
      %v1207 = vmul.f32 %v1203, 0.5
      %v1208 = vmul.f32 %v1204, 0.5
      %v1209 = vtanh.pop %v1205
      %v1210 = vtanh.pop %v1206
      %v1211 = vtanh.pop %v1207
      %v1212 = vtanh.pop %v1208
      %v1213 = vadd.f32 %v1209, 1.0
      %v1214 = vadd.f32 %v1211, 1.0
      %v1215 = vmul.f32 %v1213, 0.5
      %v1216 = vmul.f32 %v1214, 0.5
      %v1217 = vadd.f32 %v1210, 1.0
      %v1218 = vadd.f32 %v1212, 1.0
      %v1219 = vmul.f32 %v1217, 0.5
      %v1220 = vmul.f32 %v1218, 0.5
      %v1221 = vmul.f32 %v1215, %v1162
      %v1222 = vmul.f32 %v1216, %v1163
      %v1223 = vmul.f32 %v1215, %v1210
      %v1224 = vmul.f32 %v1216, %v1212
      %1227 = vrot.lane.b32.xlu0 %v1223, 64
      %v1228 = vpop.permute.xlu0 %1227
      %1229 = vrot.lane.b32.xlu0 %v1224, 64
      %v1230 = vpop.permute.xlu0 %1229
      %v1233 = vadd.f32 %v1221, %v1228
      %v1234 = vadd.f32 %v1222, %v1230
      %v1235 = vtanh.pop %v1233
      %v1236 = vtanh.pop %v1234
      %v1237 = vmul.f32 %v1219, %v1235
      %v1238 = vmul.f32 %v1220, %v1236
      %vm1239 = vcmp.gt.s32.totalorder %v674, 5
      %vm1240 = vcmp.gt.s32.totalorder %v675, 5
      %v1241 = vsel %vm1239, 1, 0
      %v1242 = vsel %vm1240, 1, 0
      %1243 = vset.pattern.permute.xlu0 0
      %1244 = vperm.xlu0 %1243, %v1241
      %v1245 = vpop.permute.xlu0 %1244
      %1246 = vset.pattern.permute.xlu0 0
      %1247 = vperm.xlu0 %1246, %v1242
      %v1248 = vpop.permute.xlu0 %1247
      %vm1249 = vcmp.eq.s32.totalorder %v1245, 1
      %vm1250 = vcmp.eq.s32.totalorder %v1248, 1
      %v1251 = vsel %vm1249, %v1233, %v1162
      %v1252 = vsel %vm1250, %v1234, %v1163
      %v1253 = vsel %vm1249, %v1237, %v1164
      %v1254 = vsel %vm1250, %v1238, %v1165
      %v1255 = vpack.c.bf16 %v1254, %v1253
      %1257 = vrot.lane.b32.xlu0 %v1255, 64
      %v1258 = vpop.permute.xlu0 %1257
      %v1260 = vsel %vm724, %v1258, 0
      %1262 = vmatpush.bf16.msra.mxu0 0
      %1263 = vmatpush.bf16.msra.mxu0 0
      %1264 = vmatpush.bf16.msra.mxu0 0
      %1265 = vmatpush.bf16.msra.mxu0 0
      %1266 = vmatpush.bf16.msra.mxu0 %v714
      %1267 = vmatpush.bf16.msra.mxu0 %v712
      %1268 = vmatpush.bf16.msra.mxu0 %v710
      %1269 = vmatpush.bf16.msra.mxu0 %v708
      %1270 = vmatmul.bf16.gmra.mxu0 %v1260
      %v1271 = vpop.f32.mrf.mxu0
      %v1272 = vadd.f32 0.0, %v1271
      %v1273 = vpop.f32.mrf.mxu0
      %v1274 = vadd.f32 0.0, %v1273
      %1275 = vdwg.mxu0
      %1276 = vmatpush.bf16.msra.mxu0 0
      %1277 = vmatpush.bf16.msra.mxu0 0
      %1278 = vmatpush.bf16.msra.mxu0 0
      %1279 = vmatpush.bf16.msra.mxu0 0
      %1280 = vmatpush.bf16.msra.mxu0 %v715
      %1281 = vmatpush.bf16.msra.mxu0 %v713
      %1282 = vmatpush.bf16.msra.mxu0 %v711
      %1283 = vmatpush.bf16.msra.mxu0 %v709
      %1284 = vmatmul.bf16.gmra.mxu0 %v1260
      %v1285 = vpop.f32.mrf.mxu0
      %v1286 = vadd.f32 0.0, %v1285
      %v1287 = vpop.f32.mrf.mxu0
      %v1288 = vadd.f32 0.0, %v1287
      %1289 = vdwg.mxu0
      %v1290 = vadd.f32 %v616, %v1272
      %v1291 = vadd.f32 %v665, %v1286
      %v1292 = vadd.f32 %v618, %v1274
      %v1293 = vadd.f32 %v667, %v1288
      %v1294 = vmul.f32 %v1290, 0.5
      %v1295 = vmul.f32 %v1291, 0.5
      %v1296 = vmul.f32 %v1292, 0.5
      %v1297 = vmul.f32 %v1293, 0.5
      %v1298 = vtanh.pop %v1294
      %v1299 = vtanh.pop %v1295
      %v1300 = vtanh.pop %v1296
      %v1301 = vtanh.pop %v1297
      %v1302 = vadd.f32 %v1298, 1.0
      %v1303 = vadd.f32 %v1300, 1.0
      %v1304 = vmul.f32 %v1302, 0.5
      %v1305 = vmul.f32 %v1303, 0.5
      %v1306 = vadd.f32 %v1299, 1.0
      %v1307 = vadd.f32 %v1301, 1.0
      %v1308 = vmul.f32 %v1306, 0.5
      %v1309 = vmul.f32 %v1307, 0.5
      %v1310 = vmul.f32 %v1304, %v1251
      %v1311 = vmul.f32 %v1305, %v1252
      %v1312 = vmul.f32 %v1304, %v1299
      %v1313 = vmul.f32 %v1305, %v1301
      %1316 = vrot.lane.b32.xlu0 %v1312, 64
      %v1317 = vpop.permute.xlu0 %1316
      %1318 = vrot.lane.b32.xlu0 %v1313, 64
      %v1319 = vpop.permute.xlu0 %1318
      %v1322 = vadd.f32 %v1310, %v1317
      %v1323 = vadd.f32 %v1311, %v1319
      %v1324 = vtanh.pop %v1322
      %v1325 = vtanh.pop %v1323
      %v1326 = vmul.f32 %v1308, %v1324
      %v1327 = vmul.f32 %v1309, %v1325
      %vm1328 = vcmp.gt.s32.totalorder %v674, 6
      %vm1329 = vcmp.gt.s32.totalorder %v675, 6
      %v1330 = vsel %vm1328, 1, 0
      %v1331 = vsel %vm1329, 1, 0
      %1332 = vset.pattern.permute.xlu0 0
      %1333 = vperm.xlu0 %1332, %v1330
      %v1334 = vpop.permute.xlu0 %1333
      %1335 = vset.pattern.permute.xlu0 0
      %1336 = vperm.xlu0 %1335, %v1331
      %v1337 = vpop.permute.xlu0 %1336
      %vm1338 = vcmp.eq.s32.totalorder %v1334, 1
      %vm1339 = vcmp.eq.s32.totalorder %v1337, 1
      %v1340 = vsel %vm1338, %v1322, %v1251
      %v1341 = vsel %vm1339, %v1323, %v1252
      %v1342 = vsel %vm1338, %v1326, %v1253
      %v1343 = vsel %vm1339, %v1327, %v1254
      %v1344 = vpack.c.bf16 %v1343, %v1342
      %1346 = vrot.lane.b32.xlu0 %v1344, 64
      %v1347 = vpop.permute.xlu0 %1346
      %v1349 = vsel %vm724, %v1347, 0
      %1351 = vmatpush.bf16.msra.mxu0 0
      %1352 = vmatpush.bf16.msra.mxu0 0
      %1353 = vmatpush.bf16.msra.mxu0 0
      %1354 = vmatpush.bf16.msra.mxu0 0
      %1355 = vmatpush.bf16.msra.mxu0 %v714
      %1356 = vmatpush.bf16.msra.mxu0 %v712
      %1357 = vmatpush.bf16.msra.mxu0 %v710
      %1358 = vmatpush.bf16.msra.mxu0 %v708
      %1359 = vmatmul.bf16.gmra.mxu0 %v1349
      %v1360 = vpop.f32.mrf.mxu0
      %v1361 = vadd.f32 0.0, %v1360
      %v1362 = vpop.f32.mrf.mxu0
      %v1363 = vadd.f32 0.0, %v1362
      %1364 = vdwg.mxu0
      %1365 = vmatpush.bf16.msra.mxu0 0
      %1366 = vmatpush.bf16.msra.mxu0 0
      %1367 = vmatpush.bf16.msra.mxu0 0
      %1368 = vmatpush.bf16.msra.mxu0 0
      %1369 = vmatpush.bf16.msra.mxu0 %v715
      %1370 = vmatpush.bf16.msra.mxu0 %v713
      %1371 = vmatpush.bf16.msra.mxu0 %v711
      %1372 = vmatpush.bf16.msra.mxu0 %v709
      %1373 = vmatmul.bf16.gmra.mxu0 %v1349
      %v1374 = vpop.f32.mrf.mxu0
      %v1375 = vadd.f32 0.0, %v1374
      %v1376 = vpop.f32.mrf.mxu0
      %v1377 = vadd.f32 0.0, %v1376
      %1378 = vdwg.mxu0
      %v1379 = vadd.f32 %v621, %v1361
      %v1380 = vadd.f32 %v670, %v1375
      %v1381 = vadd.f32 %v623, %v1363
      %v1382 = vadd.f32 %v672, %v1377
      %v1383 = vmul.f32 %v1379, 0.5
      %v1384 = vmul.f32 %v1380, 0.5
      %v1385 = vmul.f32 %v1381, 0.5
      %v1386 = vmul.f32 %v1382, 0.5
      %v1387 = vtanh.pop %v1383
      %v1388 = vtanh.pop %v1384
      %v1389 = vtanh.pop %v1385
      %v1390 = vtanh.pop %v1386
      %v1391 = vadd.f32 %v1387, 1.0
      %v1392 = vadd.f32 %v1389, 1.0
      %v1393 = vmul.f32 %v1391, 0.5
      %v1394 = vmul.f32 %v1392, 0.5
      %v1395 = vadd.f32 %v1388, 1.0
      %v1396 = vadd.f32 %v1390, 1.0
      %v1397 = vmul.f32 %v1395, 0.5
      %v1398 = vmul.f32 %v1396, 0.5
      %v1399 = vmul.f32 %v1393, %v1340
      %v1400 = vmul.f32 %v1394, %v1341
      %v1401 = vmul.f32 %v1393, %v1388
      %v1402 = vmul.f32 %v1394, %v1390
      %1405 = vrot.lane.b32.xlu0 %v1401, 64
      %v1406 = vpop.permute.xlu0 %1405
      %1407 = vrot.lane.b32.xlu0 %v1402, 64
      %v1408 = vpop.permute.xlu0 %1407
      %v1411 = vadd.f32 %v1399, %v1406
      %v1412 = vadd.f32 %v1400, %v1408
      %v1413 = vtanh.pop %v1411
      %v1414 = vtanh.pop %v1412
      %v1415 = vmul.f32 %v1397, %v1413
      %v1416 = vmul.f32 %v1398, %v1414
      %vm1417 = vcmp.gt.s32.totalorder %v674, 7
      %vm1418 = vcmp.gt.s32.totalorder %v675, 7
      %v1419 = vsel %vm1417, 1, 0
      %v1420 = vsel %vm1418, 1, 0
      %1421 = vset.pattern.permute.xlu0 0
      %1422 = vperm.xlu0 %1421, %v1419
      %v1423 = vpop.permute.xlu0 %1422
      %1424 = vset.pattern.permute.xlu0 0
      %1425 = vperm.xlu0 %1424, %v1420
      %v1426 = vpop.permute.xlu0 %1425
      %vm1427 = vcmp.eq.s32.totalorder %v1423, 1
      %vm1428 = vcmp.eq.s32.totalorder %v1426, 1
      %v1429 = vsel %vm1427, %v1415, %v1342
      %v1430 = vsel %vm1428, %v1416, %v1343
      %v1431 = vld [vmem:[%s5] sm:$0xff]
      %v1432 = vld [vmem:[%s5 + $0x8] sm:$0xff]
      %v1433 = vld [vmem:[%s5 + $0x10] sm:$0xff]
      %v1434 = vld [vmem:[%s5 + $0x18] sm:$0xff]
      %v1435 = vld [vmem:[%s5 + $0x20] sm:$0xff]
      %v1436 = vld [vmem:[%s5 + $0x28] sm:$0xff]
      %v1437 = vld [vmem:[%s5 + $0x30] sm:$0xff]
      %v1438 = vld [vmem:[%s5 + $0x38] sm:$0xff]
      %v1439 = vld [vmem:[%s6] sm:$0x1]
      %v1441 = vperm.slane %v1439, 0
      %1445 = vrot.lane.b32.xlu0 %v1429, 64
      %v1446 = vpop.permute.xlu0 %1445
      %1447 = vrot.lane.b32.xlu0 %v1430, 64
      %v1448 = vpop.permute.xlu0 %1447
      %v1449 = vsel %vm724, %v1446, 0
      %v1451 = vsel %vm724, %v1448, 0
      %1453 = vmatpush.msra.mxu0 0.0
      %1454 = vmatpush.msra.mxu0 0.0
      %1455 = vmatpush.msra.mxu0 0.0
      %1456 = vmatpush.msra.mxu0 0.0
      %1457 = vmatpush.msra.mxu0 0.0
      %1458 = vmatpush.msra.mxu0 0.0
      %1459 = vmatpush.msra.mxu0 0.0
      %1460 = vmatpush.msra.mxu0 0.0
      %1461 = vmatpush.msra.mxu0 %v1438
      %1462 = vmatpush.msra.mxu0 %v1437
      %1463 = vmatpush.msra.mxu0 %v1436
      %1464 = vmatpush.msra.mxu0 %v1435
      %1465 = vmatpush.msra.mxu0 %v1434
      %1466 = vmatpush.msra.mxu0 %v1433
      %1467 = vmatpush.msra.mxu0 %v1432
      %1468 = vmatpush.msra.mxu0 %v1431
      %1469 = vmatmul.f32.gmra.mxu0 %v1449
      %v1470 = vpop.f32.mrf.mxu0
      %v1471 = vadd.f32 %v1441, %v1470
      %1472 = vmatmul.f32.gmra.mxu0 %v1451
      %v1473 = vpop.f32.mrf.mxu0
      %v1474 = vadd.f32 %v1441, %v1473
      %1475 = vdwg.mxu0
      %v1476 = vxor.u32 %v1471, 2147483648
      %v1477 = vxor.u32 %v1474, 2147483648
      %v1478 = vmul.f32 %v1476, 1.442695
      %v1479 = vpow.pop %v1478
      %v1480 = vmul.f32 %v1477, 1.442695
      %v1481 = vpow.pop %v1480
      %v1482 = vadd.f32 %v1479, 1.0
      %v1483 = vadd.f32 %v1481, 1.0
      %v1484 = vrcp.pop %v1482
      %v1485 = vmul.f32 %v1482, %v1484
      %v1486 = vsub.f32 1.0, %v1485
      %v1487 = vmul.f32 %v1484, %v1486
      %v1488 = vadd.f32 %v1484, %v1487
      %vm1489 = vweird.f32 %v1482
      %vm1490 = vweird.f32 %v1484
      %vm1491 = vmor %vm1489, %vm1490
      %v1492 = vsel %vm1491, %v1484, %v1488
      %v1493 = vand.u32 2147483647, %v1482
      %vm1494 = vcmp.eq.f32.partialorder %v1493, 8.507059e+37
      %v1495 = vand.u32 %v1482, 2147483648
      %v1496 = vor.u32 1.1754944e-38, %v1495
      %v1497 = vsel %vm1494, %v1496, %v1492
      %v1498 = vmul.f32 1.0, %v1497
      %v1499 = vrcp.pop %v1483
      %v1500 = vmul.f32 %v1483, %v1499
      %v1501 = vsub.f32 1.0, %v1500
      %v1502 = vmul.f32 %v1499, %v1501
      %v1503 = vadd.f32 %v1499, %v1502
      %vm1504 = vweird.f32 %v1483
      %vm1505 = vweird.f32 %v1499
      %vm1506 = vmor %vm1504, %vm1505
      %v1507 = vsel %vm1506, %v1499, %v1503
      %v1508 = vand.u32 2147483647, %v1483
      %vm1509 = vcmp.eq.f32.partialorder %v1508, 8.507059e+37
      %v1510 = vand.u32 %v1483, 2147483648
      %v1511 = vor.u32 1.1754944e-38, %v1510
      %v1512 = vsel %vm1509, %v1511, %v1507
      %v1513 = vmul.f32 1.0, %v1512
      %v1514 = vmul.f32 %v1498, %v1513
      %v1515 = vsub.f32 %v1498, %v1513
      %v1516 = vand.u32 2147483647, %v1515
      %1518 = vrot.lane.b32.xlu0 %v1516, 16
      %v1519 = vpop.permute.xlu0 %1518
      %vm1521 = vcmask 130048
      %v1522 = vsel %vm1521, %v1514, %v1519
      %v1523 = vld [vmem:[%s7] sm:$0xff]
      %v1524 = vld [vmem:[%s7 + $0x8] sm:$0xff]
      %v1525 = vld [vmem:[%s7 + $0x10] sm:$0xff]
      %v1526 = vld [vmem:[%s7 + $0x18] sm:$0xff]
      %v1527 = vld [vmem:[%s8] sm:$0x1]
      %v1529 = vperm.slane %v1527, 0
      %vm1531 = vcmask 261120
      %v1533 = vsel %vm1531, %v1522, 0
      %1535 = vmatpush.msra.mxu0 0.0
      %1536 = vmatpush.msra.mxu0 0.0
      %1537 = vmatpush.msra.mxu0 0.0
      %1538 = vmatpush.msra.mxu0 0.0
      %1539 = vmatpush.msra.mxu0 0.0
      %1540 = vmatpush.msra.mxu0 0.0
      %1541 = vmatpush.msra.mxu0 0.0
      %1542 = vmatpush.msra.mxu0 0.0
      %1543 = vmatpush.msra.mxu0 0.0
      %1544 = vmatpush.msra.mxu0 0.0
      %1545 = vmatpush.msra.mxu0 0.0
      %1546 = vmatpush.msra.mxu0 0.0
      %1547 = vmatpush.msra.mxu0 %v1526
      %1548 = vmatpush.msra.mxu0 %v1525
      %1549 = vmatpush.msra.mxu0 %v1524
      %1550 = vmatpush.msra.mxu0 %v1523
      %1551 = vmatmul.f32.gmra.mxu0 %v1533
      %v1552 = vpop.f32.mrf.mxu0
      %v1553 = vadd.f32 %v1529, %v1552
      %1554 = vdwg.mxu0
      %v1555 = vxor.u32 %v1553, 2147483648
      %v1556 = vmul.f32 %v1555, 1.442695
      %v1557 = vpow.pop %v1556
      %v1558 = vadd.f32 %v1557, 1.0
      %v1559 = vrcp.pop %v1558
      %v1560 = vmul.f32 %v1558, %v1559
      %v1561 = vsub.f32 1.0, %v1560
      %v1562 = vmul.f32 %v1559, %v1561
      %v1563 = vadd.f32 %v1559, %v1562
      %vm1564 = vweird.f32 %v1558
      %vm1565 = vweird.f32 %v1559
      %vm1566 = vmor %vm1564, %vm1565
      %v1567 = vsel %vm1566, %v1559, %v1563
      %v1568 = vand.u32 2147483647, %v1558
      %vm1569 = vcmp.eq.f32.partialorder %v1568, 8.507059e+37
      %v1570 = vand.u32 %v1558, 2147483648
      %v1571 = vor.u32 1.1754944e-38, %v1570
      %v1572 = vsel %vm1569, %v1571, %v1567
      %v1573 = vmul.f32 1.0, %v1572
      %v1574 = vld [vmem:[%s9] sm:$0xff]
      %v1575 = vld [vmem:[%s10] sm:$0x1]
      %v1577 = vperm.slane %v1575, 0
      %vm1579 = vcmask 64512
      %v1581 = vsel %vm1579, %v1573, 0
      %1583 = vmatpush.msra.mxu0 0.0
      %1584 = vmatpush.msra.mxu0 0.0
      %1585 = vmatpush.msra.mxu0 0.0
      %1586 = vmatpush.msra.mxu0 0.0
      %1587 = vmatpush.msra.mxu0 0.0
      %1588 = vmatpush.msra.mxu0 0.0
      %1589 = vmatpush.msra.mxu0 0.0
      %1590 = vmatpush.msra.mxu0 0.0
      %1591 = vmatpush.msra.mxu0 0.0
      %1592 = vmatpush.msra.mxu0 0.0
      %1593 = vmatpush.msra.mxu0 0.0
      %1594 = vmatpush.msra.mxu0 0.0
      %1595 = vmatpush.msra.mxu0 0.0
      %1596 = vmatpush.msra.mxu0 0.0
      %1597 = vmatpush.msra.mxu0 0.0
      %1598 = vmatpush.msra.mxu0 %v1574
      %1599 = vmatmul.f32.gmra.mxu0 %v1581
      %v1600 = vpop.f32.mrf.mxu0
      %v1601 = vadd.f32 %v1577, %v1600
      %1602 = vdwg.mxu0
      %1603 = vmax.xlane.f32.xlu0 %v1601
      %v1604 = vpop.xlane.xlu0 %1603
      %v1605 = vsub.f32 %v1601, %v1604
      %v1606 = vmul.f32 %v1605, 1.442695
      %v1607 = vpow.pop %v1606
      %1608 = vadd.xlane.f32.xlu0 %v1607
      %v1609 = vpop.xlane.xlu0 %1608
      %v1610 = vlog2.pop %v1609
      %v1611 = vmul.f32 %v1610, 0.6931472
      %v1612 = vadd.f32 %v1611, %v1604
      %v1613 = vsub.f32 %v1601, %v1612
      %1614 = vst [vmem:[%s408] sm:$0xff] %v1613
      %p1615 = scmp.lt.s32.totalorder %s22, 1
      %s1616 = scalar_select %p1615, %s22, 1
      %s1617 = smul.addr %s1616, 8
      %s1618 = scalar_lea.vmem %s11, %s1617
      // Predicated region
      $region65: #{similarity_tree_lstm_forward.1} parent=63 // pred_check
        %p1619 = pneg %p281
      $region66: #{similarity_tree_lstm_forward.1} parent=63 // pred_check_branch
        %1621 = sbr.rel (%p1619) target = $region68
      $region67: #{similarity_tree_lstm_forward.1} parent=63 // pred_region
        _
      $region68: #{similarity_tree_lstm_forward.1} parent=63 // pred_fallthru
        _
    $region64: #{similarity_tree_lstm_forward.1} parent=5 // pred_fallthru
      _
    %p1622 = scmp.le.s32.totalorder 2, %s17
    // Predicated region
    $region69: #{similarity_tree_lstm_forward.1} parent=5 // pred_check
      %p1623 = pneg %p1622
    $region70: #{similarity_tree_lstm_forward.1} parent=5 // pred_check_branch
      %1625 = sbr.rel (%p1623) target = $region72
    $region71: #{similarity_tree_lstm_forward.1} parent=5 // pred_region
      %s1626 = ssub.s32 %s17, 2
      // Predicated region
      $region73: #{similarity_tree_lstm_forward.1} parent=71 // pred_check
        %p1627 = pneg %p287
      $region74: #{similarity_tree_lstm_forward.1} parent=71 // pred_check_branch
        %1629 = sbr.rel (%p1627) target = $region76
      $region75: #{similarity_tree_lstm_forward.1} parent=71 // pred_region
        %p1630 = scmp.lt.s32.totalorder %s23, 1
        %s1631 = scalar_select %p1630, %s23, 1
        %s1632 = smul.addr %s1631, 8
        %s1633 = scalar_lea.vmem %s11, %s1632
      $region76: #{similarity_tree_lstm_forward.1} parent=71 // pred_fallthru
        _
    $region72: #{similarity_tree_lstm_forward.1} parent=5 // pred_fallthru
      _
  $region6: #{similarity_tree_lstm_forward.1} parent=0 // loop_footer
    %s21 = sadd.s32 1, %s17
  $region7: #{similarity_tree_lstm_forward.1} parent=0 // loop_footer_branch
    %16 = sbr.rel target = $region3
  $region8: #{similarity_tree_lstm_forward.1} parent=0 // loop_exit
    _

</llo_original>
